<compile_context>
chip_gen: v5e
topology: v5e:2x2
jax: 0.10.0
libtpu: 0.0.40
codegen_flags: <defaults>
</compile_context>

<pallas_src>
import functools

import numpy as np
import jax
import jax.numpy as jnp
from jax import lax
from jax.experimental import pallas as pl
from jax.experimental.pallas import tpu as pltpu

C_IN = 3
C_OUT = 8
PAD = 1
MAX_TILE_COLS = 16384                # large lane-dense P-tiles for pass 1
VMEM_LIMIT = 32 * 1024 * 1024        # explicit, portable across v5e/v6e/v7x


def _pick_tile(p, max_tile):
    """Largest multiple-of-128 divisor of p that is <= max_tile, else p."""
    if p <= max_tile:
        return p
    start = max_tile - (max_tile % 128)
    for cand in range(start, 127, -128):
        if p % cand == 0:
            return cand
    # TODO(synk): if P has no multiple-of-128 divisor <= max_tile we fall back
    #             to a single (possibly huge) tile; huge odd-sized images would
    #             need a remainder-tile path instead.
    return p


def _stats_kernel(x1_ref, x2_ref, pk_ref, out_ref, *, tp):
    """Per-tile 1x1-conv recompute + in-kernel Chan accumulation of (sum, M2).

    x*_ref : (3, TP) VMEM  flattened interior pixels of one image tile
    pk_ref : (8, 8)  VMEM  cols 0-2 w1 | 3-5 w2 | 6 bias(b1+b2) | 7 pad
    out_ref: (8, 2)  VMEM  resident per image: col0 sum(z), col1 M2(z)
    """
    t = pl.program_id(1)
    pk = pk_ref[...]
    x1 = x1_ref[...].astype(jnp.float32)
    x2 = x2_ref[...].astype(jnp.float32)
    # 1x1 conv == per-channel FMA; (8,1)x(1,TP) broadcasts, fully lane-dense.
    z = (pk[:, 6:7]
         + pk[:, 0:1] * x1[0:1] + pk[:, 1:2] * x1[1:2] + pk[:, 2:3] * x1[2:3]
         + pk[:, 3:4] * x2[0:1] + pk[:, 4:5] * x2[1:2] + pk[:, 5:6] * x2[2:3])
    s = jnp.sum(z, axis=1, keepdims=True)                 # (8, 1)
    mu = s * (1.0 / tp)
    d = z - mu
    m2 = jnp.sum(d * d, axis=1, keepdims=True)            # (8, 1)

    @pl.when(t == 0)
    def _():
        out_ref[:, 0:1] = s
        out_ref[:, 1:2] = m2

    @pl.when(t > 0)
    def _():
        # Chan/Welford merge of the running (sum, M2) with this tile's (s, m2).
        n_old = t.astype(jnp.float32) * tp
        s_old = out_ref[:, 0:1]
        m2_old = out_ref[:, 1:2]
        delta = mu - s_old * (1.0 / n_old)
        out_ref[:, 0:1] = s_old + s
        out_ref[:, 1:2] = m2_old + m2 + delta * delta * (n_old * tp / (n_old + tp))


def _norm_kernel(x1_ref, x2_ref, cf_ref, out_ref, *, H, W):
    """Recompute the 1x1 conv for all 8 channels at once, apply both folded BN
    affines, multiply, and write the padded NCHW output for one image:
    border = per-channel constant fill, interior = one slice store.

    x*_ref : (3, H, W)       VMEM
    cf_ref : (12, 8, 1, 1)   VMEM  rows: 0-2 w1 | 3-5 w2 | 6 b | 7 a1 | 8 c1
                                        | 9 a2 | 10 c2 | 11 border value
    out_ref: (8, H+2, W+2)   VMEM
    """
    f32 = jnp.float32
    Ho, Wo = H + 2 * PAD, W + 2 * PAD
    w = lambda k: cf_ref[k]                               # (8, 1, 1) broadcastable
    x1 = x1_ref[...].astype(f32)                          # (3, H, W)
    x2 = x2_ref[...].astype(f32)
    z = (w(6)
         + w(0) * x1[0:1] + w(1) * x1[1:2] + w(2) * x1[2:3]
         + w(3) * x2[0:1] + w(4) * x2[1:2] + w(5) * x2[2:3])   # (8, H, W)
    v4 = z * w(7) + w(8)
    v5 = z * w(9) + w(10)
    res = v4 * v5
    out_ref[...] = jnp.broadcast_to(w(11), (C_OUT, Ho, Wo))    # border fill
    out_ref[:, PAD:PAD + H, PAD:PAD + W] = res                 # interior store


def _model_forward_impl(x1, x2, extra, params, *, max_tile=MAX_TILE_COLS):
    N, cin, H, W = x1.shape
    assert cin == C_IN and x2.shape == x1.shape
    Ho, Wo = H + 2 * PAD, W + 2 * PAD
    P = H * W
    TP = _pick_tile(P, max_tile)
    nt = P // TP
    f32 = jnp.float32

    w1 = params["w1"].reshape(C_OUT, C_IN).astype(f32)
    w2 = params["w2"].reshape(C_OUT, C_IN).astype(f32)
    b = (params["b1"] + params["b2"]).astype(f32)                    # (8,)
    pk = jnp.concatenate(
        [w1, w2, b[:, None], jnp.zeros((C_OUT, 1), f32)], axis=1)    # (8, 8)

    # Free (metadata-only) reshapes -- no HBM layout pass, no wrapper casts.
    x1f = x1.reshape(N, C_IN, P)
    x2f = x2.reshape(N, C_IN, P)

    # ---- Pass 1: tiled conv recompute + in-kernel per-image (sum, M2) -------
    stats = pl.pallas_call(
        functools.partial(_stats_kernel, tp=float(TP)),
        out_shape=jax.ShapeDtypeStruct((N, C_OUT, 2), f32),
        grid=(N, nt),
        in_specs=[
            pl.BlockSpec((None, C_IN, TP), lambda n, t: (n, 0, t)),
            pl.BlockSpec((None, C_IN, TP), lambda n, t: (n, 0, t)),
            pl.BlockSpec((C_OUT, 8), lambda n, t: (0, 0)),           # resident
        ],
        out_specs=pl.BlockSpec((None, C_OUT, 2), lambda n, t: (n, 0, 0)),
        compiler_params=pltpu.CompilerParams(
            dimension_semantics=("parallel", "arbitrary"),
            vmem_limit_bytes=VMEM_LIMIT),
    )(x1f, x2f, pk)

    # ---- Tiny per-channel glue (O(8*N)): image merge + analytic border ------
    s_img = stats[:, :, 0]                                           # (N, 8)
    m2_img = stats[:, :, 1]
    n_total = float(N * Ho * Wo)
    n_border = float(N * (Ho * Wo - P))                              # zero-pad ring
    sum_total = jnp.sum(s_img, axis=0) + n_border * b                # border z == b
    mean = sum_total / n_total
    mu_img = s_img * (1.0 / P)
    m2_total = (jnp.sum(m2_img, axis=0)
                + float(P) * jnp.sum((mu_img - mean[None, :]) ** 2, axis=0)
                + n_border * (b - mean) ** 2)
    var = m2_total / n_total                                         # biased
    eps = extra.reshape(C_OUT).astype(f32)
    inv_std = lax.rsqrt(var + eps)
    a1 = params["g1"].astype(f32) * inv_std
    c1 = params["be1"].astype(f32) - mean * a1
    a2 = params["g2"].astype(f32) * inv_std
    c2 = params["be2"].astype(f32) - mean * a2
    border_val = (b * a1 + c1) * (b * a2 + c2)                       # per-channel

    cf = jnp.stack([w1[:, 0], w1[:, 1], w1[:, 2],
                    w2[:, 0], w2[:, 1], w2[:, 2],
                    b, a1, c1, a2, c2, border_val], axis=0)          # (12, 8)
    cf = cf[:, :, None, None]                                        # (12, 8, 1, 1)

    # ---- Pass 2: channel-vectorized conv + folded BN + padded NCHW write ----
    out = pl.pallas_call(
        functools.partial(_norm_kernel, H=H, W=W),
        out_shape=jax.ShapeDtypeStruct((N, C_OUT, Ho, Wo), f32),
        grid=(N,),
        in_specs=[
            pl.BlockSpec((None, C_IN, H, W), lambda n: (n, 0, 0, 0)),
            pl.BlockSpec((None, C_IN, H, W), lambda n: (n, 0, 0, 0)),
            pl.BlockSpec((12, C_OUT, 1, 1), lambda n: (0, 0, 0, 0)),  # resident
        ],
        out_specs=pl.BlockSpec((None, C_OUT, Ho, Wo), lambda n: (n, 0, 0, 0)),
        compiler_params=pltpu.CompilerParams(
            dimension_semantics=("parallel",),
            vmem_limit_bytes=VMEM_LIMIT),
    )(x1, x2, cf)
    return out


model_forward = jax.jit(_model_forward_impl, static_argnames=("max_tile",))


def ref_forward(x1, x2, extra, params):
    """Pure-JAX reference of the interpreted PyTorch semantics (VPU-only math)."""
    def conv(x, w, bb):
        xp = jnp.pad(x, ((0, 0), (0, 0), (PAD, PAD), (PAD, PAD)))
        wm = w.reshape(C_OUT, C_IN)
        y = sum(wm[:, c].reshape(1, C_OUT, 1, 1) * xp[:, c:c + 1]
                for c in range(C_IN))
        return y + bb.reshape(1, C_OUT, 1, 1)

    v3 = conv(x1, params["w1"], params["b1"]) + conv(x2, params["w2"], params["b2"])
    eps = extra.reshape(1, C_OUT, 1, 1)
    mean = v3.mean(axis=(0, 2, 3), keepdims=True)
    var = ((v3 - mean) ** 2).mean(axis=(0, 2, 3), keepdims=True)     # biased
    xhat = (v3 - mean) * lax.rsqrt(var + eps)
    v4 = xhat * params["g1"].reshape(1, C_OUT, 1, 1) + params["be1"].reshape(1, C_OUT, 1, 1)
    v5 = xhat * params["g2"].reshape(1, C_OUT, 1, 1) + params["be2"].reshape(1, C_OUT, 1, 1)
    return v4 * v5


if __name__ == "__main__":
    key = jax.random.PRNGKey(0)
    ks = jax.random.split(key, 14)

    params = {
        "w1": jax.random.normal(ks[0], (C_OUT, C_IN, 1, 1), jnp.float32) * 0.2,
        "b1": jax.random.normal(ks[1], (C_OUT,), jnp.float32) * 0.1,
        "w2": jax.random.normal(ks[2], (C_OUT, C_IN, 1, 1), jnp.float32) * 0.2,
        "b2": jax.random.normal(ks[3], (C_OUT,), jnp.float32) * 0.1,
        "g1": 1.0 + 0.1 * jax.random.normal(ks[4], (C_OUT,), jnp.float32),
        "be1": 0.1 * jax.random.normal(ks[5], (C_OUT,), jnp.float32),
        "g2": 1.0 + 0.1 * jax.random.normal(ks[6], (C_OUT,), jnp.float32),
        "be2": 0.1 * jax.random.normal(ks[7], (C_OUT,), jnp.float32),
    }
    # Per-channel eps (kept positive so rsqrt is well defined).
    extra = jnp.abs(jax.random.normal(ks[8], (1, C_OUT, 1, 1), jnp.float32)) * 1e-3 + 1e-5

    test_cases = [
        ((2, 16, 16), ks[9], ks[10], {}),                 # small smoke test (batch=2)
        ((1, 64, 64), ks[11], ks[12], {}),                # original module shape
        ((1, 64, 64), ks[11], ks[12], {"max_tile": 1024}),  # exercises Chan-merge path
    ]
    for (n, h, w), k1, k2, kw in test_cases:
        x1 = jax.random.normal(k1, (n, C_IN, h, w), jnp.float32)
        x2 = jax.random.normal(k2, (n, C_IN, h, w), jnp.float32)
        out = jax.block_until_ready(model_forward(x1, x2, extra, params, **kw))
        ref = ref_forward(x1, x2, extra, params)
        np.testing.assert_allclose(np.asarray(out), np.asarray(ref),
                                   rtol=2e-4, atol=2e-4)

    print("KERNEL_OK")
</pallas_src>

<mosaic_0001>
module attributes {stable_mosaic.version = 11 : i64} {
  func.func @_stats_kernel(%arg0: i32, %arg1: i32, %arg2: memref<1x3x256xf32, #tpu.memory_space<vmem>>, %arg3: memref<1x3x256xf32, #tpu.memory_space<vmem>>, %arg4: memref<8x8xf32, #tpu.memory_space<vmem>>, %arg5: memref<1x8x2xf32, #tpu.memory_space<vmem>>) attributes {dimension_semantics = [#tpu.dimension_semantics<parallel>, #tpu.dimension_semantics<arbitrary>], iteration_bounds = array<i64: 2, 1>, scalar_prefetch = 0 : i64, scratch_operands = 0 : i64, tpu.core_type = #tpu.core_type<tc>, window_params = [{transform_indices = @transform_0, window_bounds = array<i64: 1, 3, 256>}, {transform_indices = @transform_1, window_bounds = array<i64: 1, 3, 256>}, {pipeline_mode = #tpu.pipeline_mode<synchronous>, transform_indices = @transform_2, window_bounds = array<i64: 8, 8>}, {transform_indices = @transform_3, window_bounds = array<i64: 1, 8, 2>}]} {
    %c0 = arith.constant 0 : index
    %c0_0 = arith.constant 0 : index
    %0 = vector.load %arg4[%c0, %c0_0] : memref<8x8xf32, #tpu.memory_space<vmem>>, vector<8x8xf32>
    %c0_1 = arith.constant 0 : index
    %c0_2 = arith.constant 0 : index
    %c0_3 = arith.constant 0 : index
    %1 = vector.load %arg2[%c0_1, %c0_2, %c0_3] : memref<1x3x256xf32, #tpu.memory_space<vmem>>, vector<1x3x256xf32>
    %2 = vector.shape_cast %1 : vector<1x3x256xf32> to vector<3x256xf32>
    %c0_4 = arith.constant 0 : index
    %c0_5 = arith.constant 0 : index
    %c0_6 = arith.constant 0 : index
    %3 = vector.load %arg3[%c0_4, %c0_5, %c0_6] : memref<1x3x256xf32, #tpu.memory_space<vmem>>, vector<1x3x256xf32>
    %4 = vector.shape_cast %3 : vector<1x3x256xf32> to vector<3x256xf32>
    %5 = vector.extract_strided_slice %0 {offsets = [0, 6], sizes = [8, 1], strides = [1, 1]} : vector<8x8xf32> to vector<8x1xf32>
    %6 = vector.extract_strided_slice %0 {offsets = [0, 0], sizes = [8, 1], strides = [1, 1]} : vector<8x8xf32> to vector<8x1xf32>
    %7 = vector.extract_strided_slice %2 {offsets = [0, 0], sizes = [1, 256], strides = [1, 1]} : vector<3x256xf32> to vector<1x256xf32>
    %8 = vector.broadcast %6 : vector<8x1xf32> to vector<8x256xf32>
    %9 = vector.broadcast %7 : vector<1x256xf32> to vector<8x256xf32>
    %10 = arith.mulf %8, %9 : vector<8x256xf32>
    %11 = vector.broadcast %5 : vector<8x1xf32> to vector<8x256xf32>
    %12 = arith.addf %11, %10 : vector<8x256xf32>
    %13 = vector.extract_strided_slice %0 {offsets = [0, 1], sizes = [8, 1], strides = [1, 1]} : vector<8x8xf32> to vector<8x1xf32>
    %14 = vector.extract_strided_slice %2 {offsets = [1, 0], sizes = [1, 256], strides = [1, 1]} : vector<3x256xf32> to vector<1x256xf32>
    %15 = vector.broadcast %13 : vector<8x1xf32> to vector<8x256xf32>
    %16 = vector.broadcast %14 : vector<1x256xf32> to vector<8x256xf32>
    %17 = arith.mulf %15, %16 : vector<8x256xf32>
    %18 = arith.addf %12, %17 : vector<8x256xf32>
    %19 = vector.extract_strided_slice %0 {offsets = [0, 2], sizes = [8, 1], strides = [1, 1]} : vector<8x8xf32> to vector<8x1xf32>
    %20 = vector.extract_strided_slice %2 {offsets = [2, 0], sizes = [1, 256], strides = [1, 1]} : vector<3x256xf32> to vector<1x256xf32>
    %21 = vector.broadcast %19 : vector<8x1xf32> to vector<8x256xf32>
    %22 = vector.broadcast %20 : vector<1x256xf32> to vector<8x256xf32>
    %23 = arith.mulf %21, %22 : vector<8x256xf32>
    %24 = arith.addf %18, %23 : vector<8x256xf32>
    %25 = vector.extract_strided_slice %0 {offsets = [0, 3], sizes = [8, 1], strides = [1, 1]} : vector<8x8xf32> to vector<8x1xf32>
    %26 = vector.extract_strided_slice %4 {offsets = [0, 0], sizes = [1, 256], strides = [1, 1]} : vector<3x256xf32> to vector<1x256xf32>
    %27 = vector.broadcast %25 : vector<8x1xf32> to vector<8x256xf32>
    %28 = vector.broadcast %26 : vector<1x256xf32> to vector<8x256xf32>
    %29 = arith.mulf %27, %28 : vector<8x256xf32>
    %30 = arith.addf %24, %29 : vector<8x256xf32>
    %31 = vector.extract_strided_slice %0 {offsets = [0, 4], sizes = [8, 1], strides = [1, 1]} : vector<8x8xf32> to vector<8x1xf32>
    %32 = vector.extract_strided_slice %4 {offsets = [1, 0], sizes = [1, 256], strides = [1, 1]} : vector<3x256xf32> to vector<1x256xf32>
    %33 = vector.broadcast %31 : vector<8x1xf32> to vector<8x256xf32>
    %34 = vector.broadcast %32 : vector<1x256xf32> to vector<8x256xf32>
    %35 = arith.mulf %33, %34 : vector<8x256xf32>
    %36 = arith.addf %30, %35 : vector<8x256xf32>
    %37 = vector.extract_strided_slice %0 {offsets = [0, 5], sizes = [8, 1], strides = [1, 1]} : vector<8x8xf32> to vector<8x1xf32>
    %38 = vector.extract_strided_slice %4 {offsets = [2, 0], sizes = [1, 256], strides = [1, 1]} : vector<3x256xf32> to vector<1x256xf32>
    %39 = vector.broadcast %37 : vector<8x1xf32> to vector<8x256xf32>
    %40 = vector.broadcast %38 : vector<1x256xf32> to vector<8x256xf32>
    %41 = arith.mulf %39, %40 : vector<8x256xf32>
    %42 = arith.addf %36, %41 : vector<8x256xf32>
    %cst = arith.constant dense<0.000000e+00> : vector<8xf32>
    %43 = vector.multi_reduction <add>, %42, %cst [1] : vector<8x256xf32> to vector<8xf32>
    %44 = vector.shape_cast %43 : vector<8xf32> to vector<8x1xf32>
    %cst_7 = arith.constant 3.906250e-03 : f32
    %45 = vector.broadcast %cst_7 : f32 to vector<8x1xf32>
    %46 = arith.mulf %44, %45 : vector<8x1xf32>
    %47 = vector.broadcast %46 : vector<8x1xf32> to vector<8x256xf32>
    %48 = arith.subf %42, %47 : vector<8x256xf32>
    %49 = arith.mulf %48, %48 : vector<8x256xf32>
    %cst_8 = arith.constant dense<0.000000e+00> : vector<8xf32>
    %50 = vector.multi_reduction <add>, %49, %cst_8 [1] : vector<8x256xf32> to vector<8xf32>
    %51 = vector.shape_cast %50 : vector<8xf32> to vector<8x1xf32>
    %c0_i32 = arith.constant 0 : i32
    %52 = arith.cmpi eq, %arg1, %c0_i32 : i32
    %53 = arith.extui %52 : i1 to i32
    %c0_i32_9 = arith.constant 0 : i32
    %54 = arith.cmpi ne, %53, %c0_i32_9 : i32
    scf.if %54 {
      %c0_12 = arith.constant 0 : index
      %c0_13 = arith.constant 0 : index
      %c0_14 = arith.constant 0 : index
      %58 = vector.load %arg5[%c0_12, %c0_13, %c0_14] : memref<1x8x2xf32, #tpu.memory_space<vmem>>, vector<1x8x1xf32>
      %59 = vector.shape_cast %58 : vector<1x8x1xf32> to vector<8x1xf32>
      %60 = vector.shape_cast %44 : vector<8x1xf32> to vector<1x8x1xf32>
      tpu.vector_store %arg5[%c0_12, %c0_13, %c0_14], %60 {strides = array<i32>} : memref<1x8x2xf32, #tpu.memory_space<vmem>>, vector<1x8x1xf32>,
      %c0_15 = arith.constant 0 : index
      %c0_16 = arith.constant 0 : index
      %c1 = arith.constant 1 : index
      %61 = vector.load %arg5[%c0_15, %c0_16, %c1] : memref<1x8x2xf32, #tpu.memory_space<vmem>>, vector<1x8x1xf32>
      %62 = vector.shape_cast %61 : vector<1x8x1xf32> to vector<8x1xf32>
      %63 = vector.shape_cast %51 : vector<8x1xf32> to vector<1x8x1xf32>
      tpu.vector_store %arg5[%c0_15, %c0_16, %c1], %63 {strides = array<i32>} : memref<1x8x2xf32, #tpu.memory_space<vmem>>, vector<1x8x1xf32>,
    } else {
    }
    %c0_i32_10 = arith.constant 0 : i32
    %55 = arith.cmpi sgt, %arg1, %c0_i32_10 : i32
    %56 = arith.extui %55 : i1 to i32
    %c0_i32_11 = arith.constant 0 : i32
    %57 = arith.cmpi ne, %56, %c0_i32_11 : i32
    scf.if %57 {
      %58 = arith.sitofp %arg1 : i32 to f32
      %cst_12 = arith.constant 2.560000e+02 : f32
      %59 = arith.mulf %58, %cst_12 : f32
      %c0_13 = arith.constant 0 : index
      %c0_14 = arith.constant 0 : index
      %c0_15 = arith.constant 0 : index
      %60 = vector.load %arg5[%c0_13, %c0_14, %c0_15] : memref<1x8x2xf32, #tpu.memory_space<vmem>>, vector<1x8x1xf32>
      %61 = vector.shape_cast %60 : vector<1x8x1xf32> to vector<8x1xf32>
      %c0_16 = arith.constant 0 : index
      %c0_17 = arith.constant 0 : index
      %c1 = arith.constant 1 : index
      %62 = vector.load %arg5[%c0_16, %c0_17, %c1] : memref<1x8x2xf32, #tpu.memory_space<vmem>>, vector<1x8x1xf32>
      %63 = vector.shape_cast %62 : vector<1x8x1xf32> to vector<8x1xf32>
      %cst_18 = arith.constant 1.000000e+00 : f32
      %64 = arith.divf %cst_18, %59 : f32
      %65 = vector.broadcast %64 : f32 to vector<8x1xf32>
      %66 = arith.mulf %61, %65 : vector<8x1xf32>
      %67 = arith.subf %46, %66 : vector<8x1xf32>
      %68 = arith.addf %61, %44 : vector<8x1xf32>
      %c0_19 = arith.constant 0 : index
      %c0_20 = arith.constant 0 : index
      %c0_21 = arith.constant 0 : index
      %69 = vector.load %arg5[%c0_19, %c0_20, %c0_21] : memref<1x8x2xf32, #tpu.memory_space<vmem>>, vector<1x8x1xf32>
      %70 = vector.shape_cast %69 : vector<1x8x1xf32> to vector<8x1xf32>
      %71 = vector.shape_cast %68 : vector<8x1xf32> to vector<1x8x1xf32>
      tpu.vector_store %arg5[%c0_19, %c0_20, %c0_21], %71 {strides = array<i32>} : memref<1x8x2xf32, #tpu.memory_space<vmem>>, vector<1x8x1xf32>,
      %72 = arith.addf %63, %51 : vector<8x1xf32>
      %73 = arith.mulf %67, %67 : vector<8x1xf32>
      %cst_22 = arith.constant 2.560000e+02 : f32
      %74 = arith.mulf %59, %cst_22 : f32
      %cst_23 = arith.constant 2.560000e+02 : f32
      %75 = arith.addf %59, %cst_23 : f32
      %76 = arith.divf %74, %75 : f32
      %77 = vector.broadcast %76 : f32 to vector<8x1xf32>
      %78 = arith.mulf %73, %77 : vector<8x1xf32>
      %79 = arith.addf %72, %78 : vector<8x1xf32>
      %c0_24 = arith.constant 0 : index
      %c0_25 = arith.constant 0 : index
      %c1_26 = arith.constant 1 : index
      %80 = vector.load %arg5[%c0_24, %c0_25, %c1_26] : memref<1x8x2xf32, #tpu.memory_space<vmem>>, vector<1x8x1xf32>
      %81 = vector.shape_cast %80 : vector<1x8x1xf32> to vector<8x1xf32>
      %82 = vector.shape_cast %79 : vector<8x1xf32> to vector<1x8x1xf32>
      tpu.vector_store %arg5[%c0_24, %c0_25, %c1_26], %82 {strides = array<i32>} : memref<1x8x2xf32, #tpu.memory_space<vmem>>, vector<1x8x1xf32>,
    } else {
    }
    return
  }
  func.func @transform_0(%arg0: i32, %arg1: i32) -> (i32, i32, i32) {
    %c0_i32 = arith.constant 0 : i32
    %c0_i32_0 = arith.constant 0 : i32
    return %arg0, %c0_i32, %arg1 : i32, i32, i32
  }
  func.func @transform_1(%arg0: i32, %arg1: i32) -> (i32, i32, i32) {
    %c0_i32 = arith.constant 0 : i32
    %c0_i32_0 = arith.constant 0 : i32
    return %arg0, %c0_i32, %arg1 : i32, i32, i32
  }
  func.func @transform_2(%arg0: i32, %arg1: i32) -> (i32, i32) {
    %c0_i32 = arith.constant 0 : i32
    %c0_i32_0 = arith.constant 0 : i32
    %c0_i32_1 = arith.constant 0 : i32
    return %c0_i32, %c0_i32_0 : i32, i32
  }
  func.func @transform_3(%arg0: i32, %arg1: i32) -> (i32, i32, i32) {
    %c0_i32 = arith.constant 0 : i32
    %c0_i32_0 = arith.constant 0 : i32
    %c0_i32_1 = arith.constant 0 : i32
    return %arg0, %c0_i32, %c0_i32_0 : i32, i32, i32
  }
}

module attributes {stable_mosaic.version = 11 : i64} {
  func.func @_norm_kernel(%arg0: i32, %arg1: memref<1x3x16x16xf32, #tpu.memory_space<vmem>>, %arg2: memref<1x3x16x16xf32, #tpu.memory_space<vmem>>, %arg3: memref<12x8x1x1xf32, #tpu.memory_space<vmem>>, %arg4: memref<1x8x18x18xf32, #tpu.memory_space<vmem>>) attributes {dimension_semantics = [#tpu.dimension_semantics<parallel>], iteration_bounds = array<i64: 2>, scalar_prefetch = 0 : i64, scratch_operands = 0 : i64, tpu.core_type = #tpu.core_type<tc>, window_params = [{transform_indices = @transform_0, window_bounds = array<i64: 1, 3, 16, 16>}, {transform_indices = @transform_1, window_bounds = array<i64: 1, 3, 16, 16>}, {pipeline_mode = #tpu.pipeline_mode<synchronous>, transform_indices = @transform_2, window_bounds = array<i64: 12, 8, 1, 1>}, {transform_indices = @transform_3, window_bounds = array<i64: 1, 8, 18, 18>}]} {
    %c0 = arith.constant 0 : index
    %c0_0 = arith.constant 0 : index
    %c0_1 = arith.constant 0 : index
    %c0_2 = arith.constant 0 : index
    %0 = vector.load %arg1[%c0, %c0_0, %c0_1, %c0_2] : memref<1x3x16x16xf32, #tpu.memory_space<vmem>>, vector<1x3x16x16xf32>
    %1 = vector.shape_cast %0 : vector<1x3x16x16xf32> to vector<3x16x16xf32>
    %c0_3 = arith.constant 0 : index
    %c0_4 = arith.constant 0 : index
    %c0_5 = arith.constant 0 : index
    %c0_6 = arith.constant 0 : index
    %2 = vector.load %arg2[%c0_3, %c0_4, %c0_5, %c0_6] : memref<1x3x16x16xf32, #tpu.memory_space<vmem>>, vector<1x3x16x16xf32>
    %3 = vector.shape_cast %2 : vector<1x3x16x16xf32> to vector<3x16x16xf32>
    %c6 = arith.constant 6 : index
    %c0_7 = arith.constant 0 : index
    %c0_8 = arith.constant 0 : index
    %c0_9 = arith.constant 0 : index
    %4 = vector.load %arg3[%c6, %c0_7, %c0_8, %c0_9] : memref<12x8x1x1xf32, #tpu.memory_space<vmem>>, vector<1x8x1x1xf32>
    %5 = vector.shape_cast %4 : vector<1x8x1x1xf32> to vector<8x1x1xf32>
    %c0_10 = arith.constant 0 : index
    %c0_11 = arith.constant 0 : index
    %c0_12 = arith.constant 0 : index
    %c0_13 = arith.constant 0 : index
    %6 = vector.load %arg3[%c0_10, %c0_11, %c0_12, %c0_13] : memref<12x8x1x1xf32, #tpu.memory_space<vmem>>, vector<1x8x1x1xf32>
    %7 = vector.shape_cast %6 : vector<1x8x1x1xf32> to vector<8x1x1xf32>
    %8 = vector.extract_strided_slice %1 {offsets = [0, 0, 0], sizes = [1, 16, 16], strides = [1, 1, 1]} : vector<3x16x16xf32> to vector<1x16x16xf32>
    %9 = vector.broadcast %7 : vector<8x1x1xf32> to vector<8x16x16xf32>
    %10 = vector.broadcast %8 : vector<1x16x16xf32> to vector<8x16x16xf32>
    %11 = arith.mulf %9, %10 : vector<8x16x16xf32>
    %12 = vector.broadcast %5 : vector<8x1x1xf32> to vector<8x16x16xf32>
    %13 = arith.addf %12, %11 : vector<8x16x16xf32>
    %c1 = arith.constant 1 : index
    %c0_14 = arith.constant 0 : index
    %c0_15 = arith.constant 0 : index
    %c0_16 = arith.constant 0 : index
    %14 = vector.load %arg3[%c1, %c0_14, %c0_15, %c0_16] : memref<12x8x1x1xf32, #tpu.memory_space<vmem>>, vector<1x8x1x1xf32>
    %15 = vector.shape_cast %14 : vector<1x8x1x1xf32> to vector<8x1x1xf32>
    %16 = vector.extract_strided_slice %1 {offsets = [1, 0, 0], sizes = [1, 16, 16], strides = [1, 1, 1]} : vector<3x16x16xf32> to vector<1x16x16xf32>
    %17 = vector.broadcast %15 : vector<8x1x1xf32> to vector<8x16x16xf32>
    %18 = vector.broadcast %16 : vector<1x16x16xf32> to vector<8x16x16xf32>
    %19 = arith.mulf %17, %18 : vector<8x16x16xf32>
    %20 = arith.addf %13, %19 : vector<8x16x16xf32>
    %c2 = arith.constant 2 : index
    %c0_17 = arith.constant 0 : index
    %c0_18 = arith.constant 0 : index
    %c0_19 = arith.constant 0 : index
    %21 = vector.load %arg3[%c2, %c0_17, %c0_18, %c0_19] : memref<12x8x1x1xf32, #tpu.memory_space<vmem>>, vector<1x8x1x1xf32>
    %22 = vector.shape_cast %21 : vector<1x8x1x1xf32> to vector<8x1x1xf32>
    %23 = vector.extract_strided_slice %1 {offsets = [2, 0, 0], sizes = [1, 16, 16], strides = [1, 1, 1]} : vector<3x16x16xf32> to vector<1x16x16xf32>
    %24 = vector.broadcast %22 : vector<8x1x1xf32> to vector<8x16x16xf32>
    %25 = vector.broadcast %23 : vector<1x16x16xf32> to vector<8x16x16xf32>
    %26 = arith.mulf %24, %25 : vector<8x16x16xf32>
    %27 = arith.addf %20, %26 : vector<8x16x16xf32>
    %c3 = arith.constant 3 : index
    %c0_20 = arith.constant 0 : index
    %c0_21 = arith.constant 0 : index
    %c0_22 = arith.constant 0 : index
    %28 = vector.load %arg3[%c3, %c0_20, %c0_21, %c0_22] : memref<12x8x1x1xf32, #tpu.memory_space<vmem>>, vector<1x8x1x1xf32>
    %29 = vector.shape_cast %28 : vector<1x8x1x1xf32> to vector<8x1x1xf32>
    %30 = vector.extract_strided_slice %3 {offsets = [0, 0, 0], sizes = [1, 16, 16], strides = [1, 1, 1]} : vector<3x16x16xf32> to vector<1x16x16xf32>
    %31 = vector.broadcast %29 : vector<8x1x1xf32> to vector<8x16x16xf32>
    %32 = vector.broadcast %30 : vector<1x16x16xf32> to vector<8x16x16xf32>
    %33 = arith.mulf %31, %32 : vector<8x16x16xf32>
    %34 = arith.addf %27, %33 : vector<8x16x16xf32>
    %c4 = arith.constant 4 : index
    %c0_23 = arith.constant 0 : index
    %c0_24 = arith.constant 0 : index
    %c0_25 = arith.constant 0 : index
    %35 = vector.load %arg3[%c4, %c0_23, %c0_24, %c0_25] : memref<12x8x1x1xf32, #tpu.memory_space<vmem>>, vector<1x8x1x1xf32>
    %36 = vector.shape_cast %35 : vector<1x8x1x1xf32> to vector<8x1x1xf32>
    %37 = vector.extract_strided_slice %3 {offsets = [1, 0, 0], sizes = [1, 16, 16], strides = [1, 1, 1]} : vector<3x16x16xf32> to vector<1x16x16xf32>
    %38 = vector.broadcast %36 : vector<8x1x1xf32> to vector<8x16x16xf32>
    %39 = vector.broadcast %37 : vector<1x16x16xf32> to vector<8x16x16xf32>
    %40 = arith.mulf %38, %39 : vector<8x16x16xf32>
    %41 = arith.addf %34, %40 : vector<8x16x16xf32>
    %c5 = arith.constant 5 : index
    %c0_26 = arith.constant 0 : index
    %c0_27 = arith.constant 0 : index
    %c0_28 = arith.constant 0 : index
    %42 = vector.load %arg3[%c5, %c0_26, %c0_27, %c0_28] : memref<12x8x1x1xf32, #tpu.memory_space<vmem>>, vector<1x8x1x1xf32>
    %43 = vector.shape_cast %42 : vector<1x8x1x1xf32> to vector<8x1x1xf32>
    %44 = vector.extract_strided_slice %3 {offsets = [2, 0, 0], sizes = [1, 16, 16], strides = [1, 1, 1]} : vector<3x16x16xf32> to vector<1x16x16xf32>
    %45 = vector.broadcast %43 : vector<8x1x1xf32> to vector<8x16x16xf32>
    %46 = vector.broadcast %44 : vector<1x16x16xf32> to vector<8x16x16xf32>
    %47 = arith.mulf %45, %46 : vector<8x16x16xf32>
    %48 = arith.addf %41, %47 : vector<8x16x16xf32>
    %c7 = arith.constant 7 : index
    %c0_29 = arith.constant 0 : index
    %c0_30 = arith.constant 0 : index
    %c0_31 = arith.constant 0 : index
    %49 = vector.load %arg3[%c7, %c0_29, %c0_30, %c0_31] : memref<12x8x1x1xf32, #tpu.memory_space<vmem>>, vector<1x8x1x1xf32>
    %50 = vector.shape_cast %49 : vector<1x8x1x1xf32> to vector<8x1x1xf32>
    %51 = vector.broadcast %50 : vector<8x1x1xf32> to vector<8x16x16xf32>
    %52 = arith.mulf %48, %51 : vector<8x16x16xf32>
    %c8 = arith.constant 8 : index
    %c0_32 = arith.constant 0 : index
    %c0_33 = arith.constant 0 : index
    %c0_34 = arith.constant 0 : index
    %53 = vector.load %arg3[%c8, %c0_32, %c0_33, %c0_34] : memref<12x8x1x1xf32, #tpu.memory_space<vmem>>, vector<1x8x1x1xf32>
    %54 = vector.shape_cast %53 : vector<1x8x1x1xf32> to vector<8x1x1xf32>
    %55 = vector.broadcast %54 : vector<8x1x1xf32> to vector<8x16x16xf32>
    %56 = arith.addf %52, %55 : vector<8x16x16xf32>
    %c9 = arith.constant 9 : index
    %c0_35 = arith.constant 0 : index
    %c0_36 = arith.constant 0 : index
    %c0_37 = arith.constant 0 : index
    %57 = vector.load %arg3[%c9, %c0_35, %c0_36, %c0_37] : memref<12x8x1x1xf32, #tpu.memory_space<vmem>>, vector<1x8x1x1xf32>
    %58 = vector.shape_cast %57 : vector<1x8x1x1xf32> to vector<8x1x1xf32>
    %59 = vector.broadcast %58 : vector<8x1x1xf32> to vector<8x16x16xf32>
    %60 = arith.mulf %48, %59 : vector<8x16x16xf32>
    %c10 = arith.constant 10 : index
    %c0_38 = arith.constant 0 : index
    %c0_39 = arith.constant 0 : index
    %c0_40 = arith.constant 0 : index
    %61 = vector.load %arg3[%c10, %c0_38, %c0_39, %c0_40] : memref<12x8x1x1xf32, #tpu.memory_space<vmem>>, vector<1x8x1x1xf32>
    %62 = vector.shape_cast %61 : vector<1x8x1x1xf32> to vector<8x1x1xf32>
    %63 = vector.broadcast %62 : vector<8x1x1xf32> to vector<8x16x16xf32>
    %64 = arith.addf %60, %63 : vector<8x16x16xf32>
    %65 = arith.mulf %56, %64 : vector<8x16x16xf32>
    %c11 = arith.constant 11 : index
    %c0_41 = arith.constant 0 : index
    %c0_42 = arith.constant 0 : index
    %c0_43 = arith.constant 0 : index
    %66 = vector.load %arg3[%c11, %c0_41, %c0_42, %c0_43] : memref<12x8x1x1xf32, #tpu.memory_space<vmem>>, vector<1x8x1x1xf32>
    %67 = vector.shape_cast %66 : vector<1x8x1x1xf32> to vector<8x1x1xf32>
    %68 = vector.shape_cast %67 : vector<8x1x1xf32> to vector<8x1x1xf32>
    %69 = vector.broadcast %68 : vector<8x1x1xf32> to vector<8x18x18xf32>
    %c0_44 = arith.constant 0 : index
    %c0_45 = arith.constant 0 : index
    %c0_46 = arith.constant 0 : index
    %c0_47 = arith.constant 0 : index
    %70 = vector.load %arg4[%c0_44, %c0_45, %c0_46, %c0_47] : memref<1x8x18x18xf32, #tpu.memory_space<vmem>>, vector<1x8x18x18xf32>
    %71 = vector.shape_cast %70 : vector<1x8x18x18xf32> to vector<8x18x18xf32>
    %72 = vector.shape_cast %69 : vector<8x18x18xf32> to vector<1x8x18x18xf32>
    tpu.vector_store %arg4[%c0_44, %c0_45, %c0_46, %c0_47], %72 {strides = array<i32>} : memref<1x8x18x18xf32, #tpu.memory_space<vmem>>, vector<1x8x18x18xf32>,
    %c0_48 = arith.constant 0 : index
    %c0_49 = arith.constant 0 : index
    %c1_50 = arith.constant 1 : index
    %c1_51 = arith.constant 1 : index
    %73 = vector.load %arg4[%c0_48, %c0_49, %c1_50, %c1_51] : memref<1x8x18x18xf32, #tpu.memory_space<vmem>>, vector<1x8x16x16xf32>
    %74 = vector.shape_cast %73 : vector<1x8x16x16xf32> to vector<8x16x16xf32>
    %75 = vector.shape_cast %65 : vector<8x16x16xf32> to vector<1x8x16x16xf32>
    tpu.vector_store %arg4[%c0_48, %c0_49, %c1_50, %c1_51], %75 {strides = array<i32>} : memref<1x8x18x18xf32, #tpu.memory_space<vmem>>, vector<1x8x16x16xf32>,
    return
  }
  func.func @transform_0(%arg0: i32) -> (i32, i32, i32, i32) {
    %c0_i32 = arith.constant 0 : i32
    %c0_i32_0 = arith.constant 0 : i32
    %c0_i32_1 = arith.constant 0 : i32
    %c0_i32_2 = arith.constant 0 : i32
    return %arg0, %c0_i32, %c0_i32_0, %c0_i32_1 : i32, i32, i32, i32
  }
  func.func @transform_1(%arg0: i32) -> (i32, i32, i32, i32) {
    %c0_i32 = arith.constant 0 : i32
    %c0_i32_0 = arith.constant 0 : i32
    %c0_i32_1 = arith.constant 0 : i32
    %c0_i32_2 = arith.constant 0 : i32
    return %arg0, %c0_i32, %c0_i32_0, %c0_i32_1 : i32, i32, i32, i32
  }
  func.func @transform_2(%arg0: i32) -> (i32, i32, i32, i32) {
    %c0_i32 = arith.constant 0 : i32
    %c0_i32_0 = arith.constant 0 : i32
    %c0_i32_1 = arith.constant 0 : i32
    %c0_i32_2 = arith.constant 0 : i32
    %c0_i32_3 = arith.constant 0 : i32
    return %c0_i32, %c0_i32_0, %c0_i32_1, %c0_i32_2 : i32, i32, i32, i32
  }
  func.func @transform_3(%arg0: i32) -> (i32, i32, i32, i32) {
    %c0_i32 = arith.constant 0 : i32
    %c0_i32_0 = arith.constant 0 : i32
    %c0_i32_1 = arith.constant 0 : i32
    %c0_i32_2 = arith.constant 0 : i32
    return %arg0, %c0_i32, %c0_i32_0, %c0_i32_1 : i32, i32, i32, i32
  }
}

</mosaic_0001>

<llo_original>
// kernel: _model_forward_impl.2
$region0: #{_model_forward_impl.2}
  #allocation0 [shape = 'u32[]', space=smem, size = 0x4, offset = 0x4, fixed_abs, tag = 'smem constant byte address 0x4 - core index']
  #allocation1 [shape = 'u32[72,128]{1,0:T(1,128)}', space=vmem, size = 0x9000, scoped, tag = 'internal scratch']
  %s0 = inlined_call_operand.vmem [shape: f32[2,3,256], index: 0, kind: input, shape index: {}]
  %s1 = inlined_call_operand.vmem [shape: f32[2,3,256], index: 1, kind: input, shape index: {}]
  %s2 = inlined_call_operand.vmem [shape: f32[8,8], index: 2, kind: input, shape index: {}]
  %s3 = inlined_call_operand.vmem [shape: f32[2,8,2], index: 3, kind: output, shape index: {}]
  %s4 = sld [smem:[#allocation0]]
  $region53: #{_model_forward_impl.2} parent=0
    _
  %s6 = ssub.s32 1, %s4
  %s7 = scalar_select 0, %s6, %s4
  loop: start=0, step=1, limit=4
  $region2: #{_model_forward_impl.2} parent=0 // loop_pre_header
    _
  $region3: #{_model_forward_impl.2} parent=0 // loop_header
    %s9 = sphi 0, %s13
    %p10 = scmp.ge.s32.totalorder %s9, 4
    %s16 = sphi 0, %s28
    %s17 = sphi 0, %s24
    %s18 = sphi 0, %s16
    %s19 = sphi 0, %s17
    %s20 = sphi 0, %s18
    %s21 = sphi 0, %s19
    %s33 = sphi 0, %s35
    %s36 = sphi 0, %s33
    %s37 = sphi 0, %s36
    %s53 = sphi 0, %s37
    %s61 = sphi 0, %s63
    %s64 = sphi 0, %s61
    %s65 = sphi 0, %s64
    %s81 = sphi 0, %s65
    %s85 = sphi 0, %s85
    %s87 = sphi 0, %s85
    %s88 = sphi 0, %s87
    %s102 = sphi 0, %s88
    %s108 = sphi 0, %s110
    %s111 = sphi 0, %s108
    %s112 = sphi 0, %s111
    %s128 = sphi 0, %s112
  $region4: #{_model_forward_impl.2} parent=0 // loop_header_branch
    %12 = sbr.rel (%p10) target = $region8
  $region5: #{_model_forward_impl.2} parent=0 // loop_body
    %s14 = ssub.s32 %s9, 1
    %s15 = ssub.s32 %s9, 2
    %s22 = sadd.s32 1, %s17
    %p23 = scmp.ge.s32.totalorder %s22, 1
    %s24 = scalar_select %p23, 0, %s22
    %s25 = sadd.s32 1, %s16
    %s26 = scalar_select %p23, %s25, %s16
    %p27 = scmp.ge.s32.totalorder %s26, 2
    %s28 = scalar_select %p27, 0, %s26
    %s29 = ssub.s32 %s16, %s28
    %s30 = ssub.s32 %s17, %s24
    %s31 = sor.u32 %s29, %s30
    %p32 = scmp.eq.s32.totalorder %s31, 0
    %s34 = sadd.s32 %s33, 1
    %s35 = scalar_select %p32, %s33, %s34
    %p38 = pneg %p32
    %p39 = scmp.eq.s32.totalorder %s9, 1
    %p40 = por %p38, %p39
    %p41 = scmp.ne.s32.totalorder %s33, %s36
    %p42 = scmp.eq.s32.totalorder %s9, 0
    %p43 = por %p41, %p42
    %p44 = scmp.ne.s32.totalorder %s33, %s36
    %p45 = scmp.eq.s32.totalorder %s14, 1
    %p46 = por %p44, %p45
    %p47 = scmp.ne.s32.totalorder %s36, %s37
    %p48 = scmp.eq.s32.totalorder %s14, 0
    %p49 = por %p47, %p48
    %p50 = scmp.ne.s32.totalorder %s36, %s37
    %p51 = scmp.eq.s32.totalorder %s15, 1
    %p52 = por %p50, %p51
    %p54 = scmp.ne.s32.totalorder %s37, %s53
    %p55 = scmp.eq.s32.totalorder %s15, 0
    %p56 = por %p54, %p55
    %s57 = ssub.s32 %s16, %s28
    %s58 = ssub.s32 %s17, %s24
    %s59 = sor.u32 %s57, %s58
    %p60 = scmp.eq.s32.totalorder %s59, 0
    %s62 = sadd.s32 %s61, 1
    %s63 = scalar_select %p60, %s61, %s62
    %p66 = pneg %p60
    %p67 = scmp.eq.s32.totalorder %s9, 1
    %p68 = por %p66, %p67
    %p69 = scmp.ne.s32.totalorder %s61, %s64
    %p70 = scmp.eq.s32.totalorder %s9, 0
    %p71 = por %p69, %p70
    %p72 = scmp.ne.s32.totalorder %s61, %s64
    %p73 = scmp.eq.s32.totalorder %s14, 1
    %p74 = por %p72, %p73
    %p75 = scmp.ne.s32.totalorder %s64, %s65
    %p76 = scmp.eq.s32.totalorder %s14, 0
    %p77 = por %p75, %p76
    %p78 = scmp.ne.s32.totalorder %s64, %s65
    %p79 = scmp.eq.s32.totalorder %s15, 1
    %p80 = por %p78, %p79
    %p82 = scmp.ne.s32.totalorder %s65, %s81
    %p83 = scmp.eq.s32.totalorder %s15, 0
    %p84 = por %p82, %p83
    %s86 = sadd.s32 %s85, 1
    %p89 = scmp.eq.s32.totalorder %s9, 1
    %p90 = scmp.ne.s32.totalorder %s85, %s87
    %p91 = scmp.eq.s32.totalorder %s9, 0
    %p92 = por %p90, %p91
    %p93 = scmp.ne.s32.totalorder %s85, %s87
    %p94 = scmp.eq.s32.totalorder %s14, 1
    %p95 = por %p93, %p94
    %p96 = scmp.ne.s32.totalorder %s87, %s88
    %p97 = scmp.eq.s32.totalorder %s14, 0
    %p98 = por %p96, %p97
    %p99 = scmp.ne.s32.totalorder %s87, %s88
    %p100 = scmp.eq.s32.totalorder %s15, 1
    %p101 = por %p99, %p100
    %p103 = scmp.ne.s32.totalorder %s88, %s102
    %p104 = scmp.eq.s32.totalorder %s15, 0
    %p105 = por %p103, %p104
    %s106 = ssub.s32 %s16, %s28
    %p107 = scmp.eq.s32.totalorder %s106, 0
    %s109 = sadd.s32 %s108, 1
    %s110 = scalar_select %p107, %s108, %s109
    %p113 = pneg %p107
    %p114 = scmp.eq.s32.totalorder %s9, 1
    %p115 = por %p113, %p114
    %p116 = scmp.ne.s32.totalorder %s108, %s111
    %p117 = scmp.eq.s32.totalorder %s9, 0
    %p118 = por %p116, %p117
    %p119 = scmp.ne.s32.totalorder %s108, %s111
    %p120 = scmp.eq.s32.totalorder %s14, 1
    %p121 = por %p119, %p120
    %p122 = scmp.ne.s32.totalorder %s111, %s112
    %p123 = scmp.eq.s32.totalorder %s14, 0
    %p124 = por %p122, %p123
    %p125 = scmp.ne.s32.totalorder %s111, %s112
    %p126 = scmp.eq.s32.totalorder %s15, 1
    %p127 = por %p125, %p126
    %p129 = scmp.ne.s32.totalorder %s112, %s128
    %p130 = scmp.eq.s32.totalorder %s15, 0
    %p131 = por %p129, %p130
    %p132 = scmp.le.s32.totalorder 1, %s9
    %p133 = scmp.lt.s32.totalorder %s9, 3
    %p134 = pnand %p132, %p133
    %p135 = pneg %p134
    // Predicated region
    $region9: #{_model_forward_impl.2} parent=5 // pred_check
      _
    $region10: #{_model_forward_impl.2} parent=5 // pred_check_branch
      %137 = sbr.rel (%p134) target = $region12
    $region11: #{_model_forward_impl.2} parent=5 // pred_region
      %s138 = ssub.s32 %s9, 1
      // Predicated region
      $region13: #{_model_forward_impl.2} parent=11 // pred_check
        %p139 = pneg %p98
      $region14: #{_model_forward_impl.2} parent=11 // pred_check_branch
        %141 = sbr.rel (%p139) target = $region16
      $region15: #{_model_forward_impl.2} parent=11 // pred_region
        _
      $region16: #{_model_forward_impl.2} parent=11 // pred_fallthru
        _
    $region12: #{_model_forward_impl.2} parent=5 // pred_fallthru
      _
    %p142 = scmp.lt.s32.totalorder %s9, 2
    // Predicated region
    $region17: #{_model_forward_impl.2} parent=5 // pred_check
      %p143 = pneg %p142
    $region18: #{_model_forward_impl.2} parent=5 // pred_check_branch
      %145 = sbr.rel (%p143) target = $region20
    $region19: #{_model_forward_impl.2} parent=5 // pred_region
      // Predicated region
      $region21: #{_model_forward_impl.2} parent=19 // pred_check
        %p146 = pneg %p43
      $region22: #{_model_forward_impl.2} parent=19 // pred_check_branch
        %148 = sbr.rel (%p146) target = $region24
      $region23: #{_model_forward_impl.2} parent=19 // pred_region
        %s149 = smul.u32 2, %s17
        %p150 = scmp.lt.s32.totalorder %s16, 1
        %s151 = scalar_select %p150, %s16, 1
        %p152 = scmp.lt.s32.totalorder %s149, 1
        %s153 = scalar_select %p152, %s149, 1
        %s154 = smul.addr %s151, 2
        %s155 = sadd.s32 %s153, %s154
        %s156 = smul.addr %s155, 4
        %s157 = scalar_lea.vmem %s0, %s156
        %s158 = smul.u32 2, %s17
      $region24: #{_model_forward_impl.2} parent=19 // pred_fallthru
        _
      // Predicated region
      $region25: #{_model_forward_impl.2} parent=19 // pred_check
        %p159 = pneg %p71
      $region26: #{_model_forward_impl.2} parent=19 // pred_check_branch
        %161 = sbr.rel (%p159) target = $region28
      $region27: #{_model_forward_impl.2} parent=19 // pred_region
        %s162 = smul.u32 2, %s17
        %p163 = scmp.lt.s32.totalorder %s16, 1
        %s164 = scalar_select %p163, %s16, 1
        %p165 = scmp.lt.s32.totalorder %s162, 1
        %s166 = scalar_select %p165, %s162, 1
        %s167 = smul.addr %s164, 2
        %s168 = sadd.s32 %s166, %s167
        %s169 = smul.addr %s168, 4
        %s170 = scalar_lea.vmem %s1, %s169
        %s171 = smul.u32 2, %s17
      $region28: #{_model_forward_impl.2} parent=19 // pred_fallthru
        _
    $region20: #{_model_forward_impl.2} parent=5 // pred_fallthru
      _
    %p172 = scmp.le.s32.totalorder 1, %s9
    %p173 = scmp.lt.s32.totalorder %s9, 3
    %p174 = pnand %p172, %p173
    %p175 = pneg %p174
    // Predicated region
    $region29: #{_model_forward_impl.2} parent=5 // pred_check
      _
    $region30: #{_model_forward_impl.2} parent=5 // pred_check_branch
      %177 = sbr.rel (%p174) target = $region32
    $region31: #{_model_forward_impl.2} parent=5 // pred_region
      %s178 = ssub.s32 %s9, 1
      %s179 = smul.u32 2, %s19
      %p180 = scmp.lt.s32.totalorder %s18, 1
      %s181 = scalar_select %p180, %s18, 1
      %p182 = scmp.lt.s32.totalorder %s179, 1
      %s183 = scalar_select %p182, %s179, 1
      %s184 = smul.addr %s181, 2
      %s185 = sadd.s32 %s183, %s184
      %s186 = smul.addr %s185, 4
      %s187 = scalar_lea.vmem %s0, %s186
      %p188 = pneg %p49
      %p189 = pneg %p46
      %s190 = smul.u32 2, %s19
      %p191 = scmp.lt.s32.totalorder %s18, 1
      %s192 = scalar_select %p191, %s18, 1
      %p193 = scmp.lt.s32.totalorder %s190, 1
      %s194 = scalar_select %p193, %s190, 1
      %s195 = smul.addr %s192, 2
      %s196 = sadd.s32 %s194, %s195
      %s197 = smul.addr %s196, 4
      %s198 = scalar_lea.vmem %s1, %s197
      %p199 = pneg %p77
      %p200 = pneg %p74
      %p201 = pneg %p98
      %p202 = pneg %p95
      %p203 = pneg %p124
      %p204 = pneg %p121
      %p205 = scmp.lt.s32.totalorder %s18, 1
      %s206 = scalar_select %p205, %s18, 1
      %s207 = smul.addr %s206, 8
      %s208 = scalar_lea.vmem %s3, %s207
      %s209 = smul.u32 2, %s19
      %p210 = scmp.lt.s32.totalorder %s18, 1
      %s211 = scalar_select %p210, %s18, 1
      %p212 = scmp.lt.s32.totalorder %s209, 1
      %s213 = scalar_select %p212, %s209, 1
      %s214 = smul.addr %s211, 2
      %s215 = sadd.s32 %s213, %s214
      %s216 = smul.addr %s215, 4
      %s217 = scalar_lea.vmem %s0, %s216
      %s218 = smul.u32 2, %s19
      %s219 = smul.u32 2, %s19
      %p220 = scmp.lt.s32.totalorder %s18, 1
      %s221 = scalar_select %p220, %s18, 1
      %p222 = scmp.lt.s32.totalorder %s219, 1
      %s223 = scalar_select %p222, %s219, 1
      %s224 = smul.addr %s221, 2
      %s225 = sadd.s32 %s223, %s224
      %s226 = smul.addr %s225, 4
      %s227 = scalar_lea.vmem %s1, %s226
      %s228 = smul.u32 2, %s19
      %p229 = scmp.lt.s32.totalorder %s18, 1
      %s230 = scalar_select %p229, %s18, 1
      %s231 = smul.addr %s230, 8
      %s232 = scalar_lea.vmem %s3, %s231
      %v233 = vld [vmem:[%s2] sm:$0xff]
      %v234 = vld [vmem:[%s217] sm:$0x77]
      %v235 = vld [vmem:[%s227] sm:$0x77]
      %237 = vset.pattern.permute.xlu0 0
      %238 = vperm.xlu0 %237, %v233
      %v239 = vpop.permute.xlu0 %238
      %v242 = vperm.slane %v234, 0
      %v243 = vperm.slane %v234, 4
      %v246 = vperm.slane %v242, 0
      %v247 = vperm.slane %v243, 0
      %v248 = vmul.f32 %v239, %v246
      %v249 = vmul.f32 %v239, %v247
      %250 = vset.pattern.permute.xlu0 6
      %251 = vperm.xlu0 %250, %v233
      %v252 = vpop.permute.xlu0 %251
      %v254 = vadd.f32 %v252, %v248
      %v255 = vadd.f32 %v252, %v249
      %256 = vset.pattern.permute.xlu0 1
      %257 = vperm.xlu0 %256, %v233
      %v258 = vpop.permute.xlu0 %257
      %v260 = vperm.slane %v234, 1
      %v261 = vperm.slane %v234, 5
      %v264 = vperm.slane %v260, 1
      %v265 = vperm.slane %v261, 1
      %v266 = vmul.f32 %v258, %v264
      %v267 = vmul.f32 %v258, %v265
      %v268 = vadd.f32 %v254, %v266
      %v269 = vadd.f32 %v255, %v267
      %270 = vset.pattern.permute.xlu0 2
      %271 = vperm.xlu0 %270, %v233
      %v272 = vpop.permute.xlu0 %271
      %v274 = vperm.slane %v234, 2
      %v275 = vperm.slane %v234, 6
      %v278 = vperm.slane %v274, 2
      %v279 = vperm.slane %v275, 2
      %v280 = vmul.f32 %v272, %v278
      %v281 = vmul.f32 %v272, %v279
      %v282 = vadd.f32 %v268, %v280
      %v283 = vadd.f32 %v269, %v281
      %284 = vset.pattern.permute.xlu0 3
      %285 = vperm.xlu0 %284, %v233
      %v286 = vpop.permute.xlu0 %285
      %v289 = vperm.slane %v235, 0
      %v290 = vperm.slane %v235, 4
      %v293 = vperm.slane %v289, 0
      %v294 = vperm.slane %v290, 0
      %v295 = vmul.f32 %v286, %v293
      %v296 = vmul.f32 %v286, %v294
      %v297 = vadd.f32 %v282, %v295
      %v298 = vadd.f32 %v283, %v296
      %299 = vset.pattern.permute.xlu0 4
      %300 = vperm.xlu0 %299, %v233
      %v301 = vpop.permute.xlu0 %300
      %v303 = vperm.slane %v235, 1
      %v304 = vperm.slane %v235, 5
      %v307 = vperm.slane %v303, 1
      %v308 = vperm.slane %v304, 1
      %v309 = vmul.f32 %v301, %v307
      %v310 = vmul.f32 %v301, %v308
      %v311 = vadd.f32 %v297, %v309
      %v312 = vadd.f32 %v298, %v310
      %313 = vset.pattern.permute.xlu0 5
      %314 = vperm.xlu0 %313, %v233
      %v315 = vpop.permute.xlu0 %314
      %v317 = vperm.slane %v235, 2
      %v318 = vperm.slane %v235, 6
      %v321 = vperm.slane %v317, 2
      %v322 = vperm.slane %v318, 2
      %v323 = vmul.f32 %v315, %v321
      %v324 = vmul.f32 %v315, %v322
      %v325 = vadd.f32 %v311, %v323
      %v326 = vadd.f32 %v312, %v324
      %v327 = vadd.f32 %v325, %v326
      %328 = vadd.xlane.f32.xlu0 %v327
      %v329 = vpop.xlane.xlu0 %328
      %v330 = vmul.f32 %v329, 0.00390625
      %v331 = vsub.f32 %v325, %v330
      %v332 = vsub.f32 %v326, %v330
      %v333 = vmul.f32 %v331, %v331
      %v334 = vmul.f32 %v332, %v332
      %v335 = vadd.f32 %v333, %v334
      %336 = vadd.xlane.f32.xlu0 %v335
      %v337 = vpop.xlane.xlu0 %336
      %p338 = scmp.eq.s32.totalorder %s19, 0
      // Predicated region
      $region33: #{_model_forward_impl.2} parent=31 // pred_check
        %p339 = pneg %p338
      $region34: #{_model_forward_impl.2} parent=31 // pred_check_branch
        %341 = sbr.rel (%p339) target = $region36
      $region35: #{_model_forward_impl.2} parent=31 // pred_region
        %vm342 = vcmask 7168
        %343 = vst.msk [vmem:[%s232] sm:$0xff] %vm342, %v329
        %vm344 = vcmask 15368
        %345 = vst.msk [vmem:[%s232] sm:$0xff] %vm344, %v337
      $region36: #{_model_forward_impl.2} parent=31 // pred_fallthru
        _
      %p346 = scmp.gt.s32.totalorder %s19, 0
      // Predicated region
      $region37: #{_model_forward_impl.2} parent=31 // pred_check
        %p347 = pneg %p346
      $region38: #{_model_forward_impl.2} parent=31 // pred_check_branch
        %349 = sbr.rel (%p347) target = $region40
      $region39: #{_model_forward_impl.2} parent=31 // pred_region
        %s350 = scvt.s32.f32 %s19
        %s351 = smul.f32 %s350, 256.0
        %v352 = vld [vmem:[%s232] sm:$0xff]
        %v353 = vstv %s351
        %v354 = vrcp.pop %v353
        %v355 = vmul.f32 %v353, %v354
        %v356 = vsub.f32 1.0, %v355
        %v357 = vmul.f32 %v354, %v356
        %v358 = vadd.f32 %v354, %v357
        %vm359 = vweird.f32 %v353
        %vm360 = vweird.f32 %v354
        %vm361 = vmor %vm359, %vm360
        %v362 = vsel %vm361, %v354, %v358
        %v363 = vand.u32 2147483647, %v353
        %vm364 = vcmp.eq.f32.partialorder %v363, 8.507059e+37
        %v365 = vand.u32 %v353, 2147483648
        %v366 = vor.u32 1.1754944e-38, %v365
        %v367 = vsel %vm364, %v366, %v362
        %s368 = vtos %v367
        %v369 = vstv %s368
        %v370 = vmul.f32 %v352, %v369
        %v371 = vsub.f32 %v330, %v370
        %v372 = vadd.f32 %v352, %v329
        %vm373 = vcmask 7168
        %374 = vst.msk [vmem:[%s232] sm:$0xff] %vm373, %v372
        %v375 = vadd.f32 %v352, %v337
        %v376 = vmul.f32 %v371, %v371
        %s377 = smul.f32 %s351, 256.0
        %s378 = sadd.f32 %s351, 256.0
        %v379 = vstv %s378
        %v380 = vrcp.pop %v379
        %v381 = vmul.f32 %v379, %v380
        %v382 = vsub.f32 1.0, %v381
        %v383 = vmul.f32 %v380, %v382
        %v384 = vadd.f32 %v380, %v383
        %vm385 = vweird.f32 %v379
        %vm386 = vweird.f32 %v380
        %vm387 = vmor %vm385, %vm386
        %v388 = vsel %vm387, %v380, %v384
        %v389 = vand.u32 2147483647, %v379
        %vm390 = vcmp.eq.f32.partialorder %v389, 8.507059e+37
        %v391 = vand.u32 %v379, 2147483648
        %v392 = vor.u32 1.1754944e-38, %v391
        %v393 = vsel %vm390, %v392, %v388
        %s394 = vtos %v393
        %s395 = smul.f32 %s377, %s394
        %v396 = vstv %s395
        %v397 = vmul.f32 %v376, %v396
        %399 = vrot.lane.b32.xlu0 %v397, 1
        %v400 = vpop.permute.xlu0 %399
        %v402 = vadd.f32 %v375, %v400
        %vm403 = vcmask 15368
        %404 = vst.msk [vmem:[%s232] sm:$0xff] %vm403, %v402
      $region40: #{_model_forward_impl.2} parent=31 // pred_fallthru
        _
      %p405 = scmp.lt.s32.totalorder %s18, 1
      %s406 = scalar_select %p405, %s18, 1
      %s407 = smul.addr %s406, 8
      %s408 = scalar_lea.vmem %s3, %s407
      // Predicated region
      $region41: #{_model_forward_impl.2} parent=31 // pred_check
        %p409 = pneg %p121
      $region42: #{_model_forward_impl.2} parent=31 // pred_check_branch
        %411 = sbr.rel (%p409) target = $region44
      $region43: #{_model_forward_impl.2} parent=31 // pred_region
        _
      $region44: #{_model_forward_impl.2} parent=31 // pred_fallthru
        _
    $region32: #{_model_forward_impl.2} parent=5 // pred_fallthru
      _
    %p412 = scmp.le.s32.totalorder 2, %s9
    // Predicated region
    $region45: #{_model_forward_impl.2} parent=5 // pred_check
      %p413 = pneg %p412
    $region46: #{_model_forward_impl.2} parent=5 // pred_check_branch
      %415 = sbr.rel (%p413) target = $region48
    $region47: #{_model_forward_impl.2} parent=5 // pred_region
      %s416 = ssub.s32 %s9, 2
      // Predicated region
      $region49: #{_model_forward_impl.2} parent=47 // pred_check
        %p417 = pneg %p127
      $region50: #{_model_forward_impl.2} parent=47 // pred_check_branch
        %419 = sbr.rel (%p417) target = $region52
      $region51: #{_model_forward_impl.2} parent=47 // pred_region
        %p420 = scmp.lt.s32.totalorder %s20, 1
        %s421 = scalar_select %p420, %s20, 1
        %s422 = smul.addr %s421, 8
        %s423 = scalar_lea.vmem %s3, %s422
      $region52: #{_model_forward_impl.2} parent=47 // pred_fallthru
        _
    $region48: #{_model_forward_impl.2} parent=5 // pred_fallthru
      _
  $region6: #{_model_forward_impl.2} parent=0 // loop_footer
    %s13 = sadd.s32 1, %s9
  $region7: #{_model_forward_impl.2} parent=0 // loop_footer_branch
    %8 = sbr.rel target = $region3
  $region8: #{_model_forward_impl.2} parent=0 // loop_exit
    _

// kernel: _model_forward_impl.3
$region0: #{_model_forward_impl.3}
  #allocation0 [shape = 'u32[]', space=smem, size = 0x4, offset = 0x4, fixed_abs, tag = 'smem constant byte address 0x4 - core index']
  #allocation1 [shape = 'u32[72,128]{1,0:T(1,128)}', space=vmem, size = 0x9000, scoped, tag = 'internal scratch']
  %s0 = inlined_call_operand.vmem [shape: f32[2,3,16,16], index: 0, kind: input, shape index: {}]
  %s1 = inlined_call_operand.vmem [shape: f32[2,3,16,16], index: 1, kind: input, shape index: {}]
  %s2 = inlined_call_operand.vmem [shape: f32[12,8,1,1], index: 2, kind: input, shape index: {}]
  %s3 = inlined_call_operand.vmem [shape: f32[2,8,18,18], index: 3, kind: output, shape index: {}]
  %s4 = sld [smem:[#allocation0]]
  $region45: #{_model_forward_impl.3} parent=0
    _
  %s6 = ssub.s32 1, %s4
  %s7 = scalar_select 0, %s6, %s4
  loop: start=0, step=1, limit=4
  $region2: #{_model_forward_impl.3} parent=0 // loop_pre_header
    _
  $region3: #{_model_forward_impl.3} parent=0 // loop_header
    %s9 = sphi 0, %s13
    %p10 = scmp.ge.s32.totalorder %s9, 4
    %s19 = sphi 0, %s21
    %s22 = sphi 0, %s19
    %s23 = sphi 0, %s22
    %s39 = sphi 0, %s23
    %s45 = sphi 0, %s47
    %s48 = sphi 0, %s45
    %s49 = sphi 0, %s48
    %s65 = sphi 0, %s49
    %s69 = sphi 0, %s69
    %s71 = sphi 0, %s69
    %s72 = sphi 0, %s71
    %s86 = sphi 0, %s72
    %s92 = sphi 0, %s94
    %s95 = sphi 0, %s92
    %s96 = sphi 0, %s95
    %s112 = sphi 0, %s96
  $region4: #{_model_forward_impl.3} parent=0 // loop_header_branch
    %12 = sbr.rel (%p10) target = $region8
  $region5: #{_model_forward_impl.3} parent=0 // loop_body
    %s14 = ssub.s32 %s9, 1
    %s15 = ssub.s32 %s9, 2
    %s16 = sadd.s32 %s9, 1
    %s17 = ssub.s32 %s9, %s16
    %p18 = scmp.eq.s32.totalorder %s17, 0
    %s20 = sadd.s32 %s19, 1
    %s21 = scalar_select %p18, %s19, %s20
    %p24 = pneg %p18
    %p25 = scmp.eq.s32.totalorder %s9, 1
    %p26 = por %p24, %p25
    %p27 = scmp.ne.s32.totalorder %s19, %s22
    %p28 = scmp.eq.s32.totalorder %s9, 0
    %p29 = por %p27, %p28
    %p30 = scmp.ne.s32.totalorder %s19, %s22
    %p31 = scmp.eq.s32.totalorder %s14, 1
    %p32 = por %p30, %p31
    %p33 = scmp.ne.s32.totalorder %s22, %s23
    %p34 = scmp.eq.s32.totalorder %s14, 0
    %p35 = por %p33, %p34
    %p36 = scmp.ne.s32.totalorder %s22, %s23
    %p37 = scmp.eq.s32.totalorder %s15, 1
    %p38 = por %p36, %p37
    %p40 = scmp.ne.s32.totalorder %s23, %s39
    %p41 = scmp.eq.s32.totalorder %s15, 0
    %p42 = por %p40, %p41
    %s43 = ssub.s32 %s9, %s16
    %p44 = scmp.eq.s32.totalorder %s43, 0
    %s46 = sadd.s32 %s45, 1
    %s47 = scalar_select %p44, %s45, %s46
    %p50 = pneg %p44
    %p51 = scmp.eq.s32.totalorder %s9, 1
    %p52 = por %p50, %p51
    %p53 = scmp.ne.s32.totalorder %s45, %s48
    %p54 = scmp.eq.s32.totalorder %s9, 0
    %p55 = por %p53, %p54
    %p56 = scmp.ne.s32.totalorder %s45, %s48
    %p57 = scmp.eq.s32.totalorder %s14, 1
    %p58 = por %p56, %p57
    %p59 = scmp.ne.s32.totalorder %s48, %s49
    %p60 = scmp.eq.s32.totalorder %s14, 0
    %p61 = por %p59, %p60
    %p62 = scmp.ne.s32.totalorder %s48, %s49
    %p63 = scmp.eq.s32.totalorder %s15, 1
    %p64 = por %p62, %p63
    %p66 = scmp.ne.s32.totalorder %s49, %s65
    %p67 = scmp.eq.s32.totalorder %s15, 0
    %p68 = por %p66, %p67
    %s70 = sadd.s32 %s69, 1
    %p73 = scmp.eq.s32.totalorder %s9, 1
    %p74 = scmp.ne.s32.totalorder %s69, %s71
    %p75 = scmp.eq.s32.totalorder %s9, 0
    %p76 = por %p74, %p75
    %p77 = scmp.ne.s32.totalorder %s69, %s71
    %p78 = scmp.eq.s32.totalorder %s14, 1
    %p79 = por %p77, %p78
    %p80 = scmp.ne.s32.totalorder %s71, %s72
    %p81 = scmp.eq.s32.totalorder %s14, 0
    %p82 = por %p80, %p81
    %p83 = scmp.ne.s32.totalorder %s71, %s72
    %p84 = scmp.eq.s32.totalorder %s15, 1
    %p85 = por %p83, %p84
    %p87 = scmp.ne.s32.totalorder %s72, %s86
    %p88 = scmp.eq.s32.totalorder %s15, 0
    %p89 = por %p87, %p88
    %s90 = ssub.s32 %s9, %s16
    %p91 = scmp.eq.s32.totalorder %s90, 0
    %s93 = sadd.s32 %s92, 1
    %s94 = scalar_select %p91, %s92, %s93
    %p97 = pneg %p91
    %p98 = scmp.eq.s32.totalorder %s9, 1
    %p99 = por %p97, %p98
    %p100 = scmp.ne.s32.totalorder %s92, %s95
    %p101 = scmp.eq.s32.totalorder %s9, 0
    %p102 = por %p100, %p101
    %p103 = scmp.ne.s32.totalorder %s92, %s95
    %p104 = scmp.eq.s32.totalorder %s14, 1
    %p105 = por %p103, %p104
    %p106 = scmp.ne.s32.totalorder %s95, %s96
    %p107 = scmp.eq.s32.totalorder %s14, 0
    %p108 = por %p106, %p107
    %p109 = scmp.ne.s32.totalorder %s95, %s96
    %p110 = scmp.eq.s32.totalorder %s15, 1
    %p111 = por %p109, %p110
    %p113 = scmp.ne.s32.totalorder %s96, %s112
    %p114 = scmp.eq.s32.totalorder %s15, 0
    %p115 = por %p113, %p114
    %p116 = scmp.le.s32.totalorder 1, %s9
    %p117 = scmp.lt.s32.totalorder %s9, 3
    %p118 = pnand %p116, %p117
    %p119 = pneg %p118
    // Predicated region
    $region9: #{_model_forward_impl.3} parent=5 // pred_check
      _
    $region10: #{_model_forward_impl.3} parent=5 // pred_check_branch
      %121 = sbr.rel (%p118) target = $region12
    $region11: #{_model_forward_impl.3} parent=5 // pred_region
      %s122 = ssub.s32 %s9, 1
      // Predicated region
      $region13: #{_model_forward_impl.3} parent=11 // pred_check
        %p123 = pneg %p82
      $region14: #{_model_forward_impl.3} parent=11 // pred_check_branch
        %125 = sbr.rel (%p123) target = $region16
      $region15: #{_model_forward_impl.3} parent=11 // pred_region
        _
      $region16: #{_model_forward_impl.3} parent=11 // pred_fallthru
        _
    $region12: #{_model_forward_impl.3} parent=5 // pred_fallthru
      _
    %p126 = scmp.lt.s32.totalorder %s9, 2
    // Predicated region
    $region17: #{_model_forward_impl.3} parent=5 // pred_check
      %p127 = pneg %p126
    $region18: #{_model_forward_impl.3} parent=5 // pred_check_branch
      %129 = sbr.rel (%p127) target = $region20
    $region19: #{_model_forward_impl.3} parent=5 // pred_region
      // Predicated region
      $region21: #{_model_forward_impl.3} parent=19 // pred_check
        %p130 = pneg %p29
      $region22: #{_model_forward_impl.3} parent=19 // pred_check_branch
        %132 = sbr.rel (%p130) target = $region24
      $region23: #{_model_forward_impl.3} parent=19 // pred_region
        %p133 = scmp.lt.s32.totalorder %s9, 1
        %s134 = scalar_select %p133, %s9, 1
        %s135 = smul.addr %s134, 6
        %s136 = smul.addr %s135, 8
        %s137 = scalar_lea.vmem %s0, %s136
      $region24: #{_model_forward_impl.3} parent=19 // pred_fallthru
        _
      // Predicated region
      $region25: #{_model_forward_impl.3} parent=19 // pred_check
        %p138 = pneg %p55
      $region26: #{_model_forward_impl.3} parent=19 // pred_check_branch
        %140 = sbr.rel (%p138) target = $region28
      $region27: #{_model_forward_impl.3} parent=19 // pred_region
        %p141 = scmp.lt.s32.totalorder %s9, 1
        %s142 = scalar_select %p141, %s9, 1
        %s143 = smul.addr %s142, 6
        %s144 = smul.addr %s143, 8
        %s145 = scalar_lea.vmem %s1, %s144
      $region28: #{_model_forward_impl.3} parent=19 // pred_fallthru
        _
    $region20: #{_model_forward_impl.3} parent=5 // pred_fallthru
      _
    %p146 = scmp.le.s32.totalorder 1, %s9
    %p147 = scmp.lt.s32.totalorder %s9, 3
    %p148 = pnand %p146, %p147
    %p149 = pneg %p148
    // Predicated region
    $region29: #{_model_forward_impl.3} parent=5 // pred_check
      _
    $region30: #{_model_forward_impl.3} parent=5 // pred_check_branch
      %151 = sbr.rel (%p148) target = $region32
    $region31: #{_model_forward_impl.3} parent=5 // pred_region
      %s152 = ssub.s32 %s9, 1
      %p153 = scmp.lt.s32.totalorder %s14, 1
      %s154 = scalar_select %p153, %s14, 1
      %s155 = smul.addr %s154, 6
      %s156 = smul.addr %s155, 8
      %s157 = scalar_lea.vmem %s0, %s156
      %p158 = pneg %p35
      %p159 = pneg %p32
      %p160 = scmp.lt.s32.totalorder %s14, 1
      %s161 = scalar_select %p160, %s14, 1
      %s162 = smul.addr %s161, 6
      %s163 = smul.addr %s162, 8
      %s164 = scalar_lea.vmem %s1, %s163
      %p165 = pneg %p61
      %p166 = pneg %p58
      %p167 = pneg %p82
      %p168 = pneg %p79
      %p169 = pneg %p108
      %p170 = pneg %p105
      %p171 = scmp.lt.s32.totalorder %s14, 1
      %s172 = scalar_select %p171, %s14, 1
      %s173 = smul.addr %s172, 24
      %s174 = smul.addr %s173, 8
      %s175 = scalar_lea.vmem %s3, %s174
      %p176 = scmp.lt.s32.totalorder %s14, 1
      %s177 = scalar_select %p176, %s14, 1
      %s178 = smul.addr %s177, 6
      %s179 = smul.addr %s178, 8
      %s180 = scalar_lea.vmem %s0, %s179
      %p181 = scmp.lt.s32.totalorder %s14, 1
      %s182 = scalar_select %p181, %s14, 1
      %s183 = smul.addr %s182, 6
      %s184 = smul.addr %s183, 8
      %s185 = scalar_lea.vmem %s1, %s184
      %p186 = scmp.lt.s32.totalorder %s14, 1
      %s187 = scalar_select %p186, %s14, 1
      %s188 = smul.addr %s187, 24
      %s189 = smul.addr %s188, 8
      %s190 = scalar_lea.vmem %s3, %s189
      %v191 = vld [vmem:[%s180] sm:$0xff]
      %v192 = vld [vmem:[%s180 + $0x8] sm:$0xff]
      %v193 = vld [vmem:[%s180 + $0x10] sm:$0xff]
      %v194 = vld [vmem:[%s180 + $0x18] sm:$0xff]
      %v195 = vld [vmem:[%s180 + $0x20] sm:$0xff]
      %v196 = vld [vmem:[%s180 + $0x28] sm:$0xff]
      %v197 = vld [vmem:[%s185] sm:$0xff]
      %v198 = vld [vmem:[%s185 + $0x8] sm:$0xff]
      %v199 = vld [vmem:[%s185 + $0x10] sm:$0xff]
      %v200 = vld [vmem:[%s185 + $0x18] sm:$0xff]
      %v201 = vld [vmem:[%s185 + $0x20] sm:$0xff]
      %v202 = vld [vmem:[%s185 + $0x28] sm:$0xff]
      %s203 = scalar_lea.vmem %s2, 48
      %v204 = vld [vmem:[%s203] sm:$0x1]
      %v205 = vld [vmem:[%s203 + $0x1] sm:$0x1]
      %v206 = vld [vmem:[%s203 + $0x2] sm:$0x1]
      %v207 = vld [vmem:[%s203 + $0x3] sm:$0x1]
      %v208 = vld [vmem:[%s203 + $0x4] sm:$0x1]
      %v209 = vld [vmem:[%s203 + $0x5] sm:$0x1]
      %v210 = vld [vmem:[%s203 + $0x6] sm:$0x1]
      %v211 = vld [vmem:[%s203 + $0x7] sm:$0x1]
      %v212 = vld [vmem:[%s2] sm:$0x1]
      %v213 = vld [vmem:[%s2 + $0x1] sm:$0x1]
      %v214 = vld [vmem:[%s2 + $0x2] sm:$0x1]
      %v215 = vld [vmem:[%s2 + $0x3] sm:$0x1]
      %v216 = vld [vmem:[%s2 + $0x4] sm:$0x1]
      %v217 = vld [vmem:[%s2 + $0x5] sm:$0x1]
      %v218 = vld [vmem:[%s2 + $0x6] sm:$0x1]
      %v219 = vld [vmem:[%s2 + $0x7] sm:$0x1]
      %v228 = vperm.slane %v212, 0
      %v229 = vperm.slane %v213, 0
      %v230 = vperm.slane %v214, 0
      %v231 = vperm.slane %v215, 0
      %v232 = vperm.slane %v216, 0
      %v233 = vperm.slane %v217, 0
      %v234 = vperm.slane %v218, 0
      %v235 = vperm.slane %v219, 0
      %236 = vset.pattern.permute.xlu0 0
      %237 = vperm.xlu0 %236, %v228
      %v238 = vpop.permute.xlu0 %237
      %240 = vset.pattern.permute.xlu0 0
      %241 = vperm.xlu0 %240, %v229
      %v242 = vpop.permute.xlu0 %241
      %244 = vset.pattern.permute.xlu0 0
      %245 = vperm.xlu0 %244, %v230
      %v246 = vpop.permute.xlu0 %245
      %248 = vset.pattern.permute.xlu0 0
      %249 = vperm.xlu0 %248, %v231
      %v250 = vpop.permute.xlu0 %249
      %252 = vset.pattern.permute.xlu0 0
      %253 = vperm.xlu0 %252, %v232
      %v254 = vpop.permute.xlu0 %253
      %256 = vset.pattern.permute.xlu0 0
      %257 = vperm.xlu0 %256, %v233
      %v258 = vpop.permute.xlu0 %257
      %260 = vset.pattern.permute.xlu0 0
      %261 = vperm.xlu0 %260, %v234
      %v262 = vpop.permute.xlu0 %261
      %264 = vset.pattern.permute.xlu0 0
      %265 = vperm.xlu0 %264, %v235
      %v266 = vpop.permute.xlu0 %265
      %v268 = vmul.f32 %v238, %v191
      %v269 = vmul.f32 %v238, %v192
      %v270 = vmul.f32 %v242, %v191
      %v271 = vmul.f32 %v242, %v192
      %v272 = vmul.f32 %v246, %v191
      %v273 = vmul.f32 %v246, %v192
      %v274 = vmul.f32 %v250, %v191
      %v275 = vmul.f32 %v250, %v192
      %v276 = vmul.f32 %v254, %v191
      %v277 = vmul.f32 %v254, %v192
      %v278 = vmul.f32 %v258, %v191
      %v279 = vmul.f32 %v258, %v192
      %v280 = vmul.f32 %v262, %v191
      %v281 = vmul.f32 %v262, %v192
      %v282 = vmul.f32 %v266, %v191
      %v283 = vmul.f32 %v266, %v192
      %v292 = vperm.slane %v204, 0
      %v293 = vperm.slane %v205, 0
      %v294 = vperm.slane %v206, 0
      %v295 = vperm.slane %v207, 0
      %v296 = vperm.slane %v208, 0
      %v297 = vperm.slane %v209, 0
      %v298 = vperm.slane %v210, 0
      %v299 = vperm.slane %v211, 0
      %300 = vset.pattern.permute.xlu0 0
      %301 = vperm.xlu0 %300, %v292
      %v302 = vpop.permute.xlu0 %301
      %304 = vset.pattern.permute.xlu0 0
      %305 = vperm.xlu0 %304, %v293
      %v306 = vpop.permute.xlu0 %305
      %308 = vset.pattern.permute.xlu0 0
      %309 = vperm.xlu0 %308, %v294
      %v310 = vpop.permute.xlu0 %309
      %312 = vset.pattern.permute.xlu0 0
      %313 = vperm.xlu0 %312, %v295
      %v314 = vpop.permute.xlu0 %313
      %316 = vset.pattern.permute.xlu0 0
      %317 = vperm.xlu0 %316, %v296
      %v318 = vpop.permute.xlu0 %317
      %320 = vset.pattern.permute.xlu0 0
      %321 = vperm.xlu0 %320, %v297
      %v322 = vpop.permute.xlu0 %321
      %324 = vset.pattern.permute.xlu0 0
      %325 = vperm.xlu0 %324, %v298
      %v326 = vpop.permute.xlu0 %325
      %328 = vset.pattern.permute.xlu0 0
      %329 = vperm.xlu0 %328, %v299
      %v330 = vpop.permute.xlu0 %329
      %v332 = vadd.f32 %v302, %v268
      %v333 = vadd.f32 %v302, %v269
      %v334 = vadd.f32 %v306, %v270
      %v335 = vadd.f32 %v306, %v271
      %v336 = vadd.f32 %v310, %v272
      %v337 = vadd.f32 %v310, %v273
      %v338 = vadd.f32 %v314, %v274
      %v339 = vadd.f32 %v314, %v275
      %v340 = vadd.f32 %v318, %v276
      %v341 = vadd.f32 %v318, %v277
      %v342 = vadd.f32 %v322, %v278
      %v343 = vadd.f32 %v322, %v279
      %v344 = vadd.f32 %v326, %v280
      %v345 = vadd.f32 %v326, %v281
      %v346 = vadd.f32 %v330, %v282
      %v347 = vadd.f32 %v330, %v283
      %s348 = scalar_lea.vmem %s2, 8
      %v349 = vld [vmem:[%s348] sm:$0x1]
      %v350 = vld [vmem:[%s348 + $0x1] sm:$0x1]
      %v351 = vld [vmem:[%s348 + $0x2] sm:$0x1]
      %v352 = vld [vmem:[%s348 + $0x3] sm:$0x1]
      %v353 = vld [vmem:[%s348 + $0x4] sm:$0x1]
      %v354 = vld [vmem:[%s348 + $0x5] sm:$0x1]
      %v355 = vld [vmem:[%s348 + $0x6] sm:$0x1]
      %v356 = vld [vmem:[%s348 + $0x7] sm:$0x1]
      %v365 = vperm.slane %v349, 0
      %v366 = vperm.slane %v350, 0
      %v367 = vperm.slane %v351, 0
      %v368 = vperm.slane %v352, 0
      %v369 = vperm.slane %v353, 0
      %v370 = vperm.slane %v354, 0
      %v371 = vperm.slane %v355, 0
      %v372 = vperm.slane %v356, 0
      %373 = vset.pattern.permute.xlu0 0
      %374 = vperm.xlu0 %373, %v365
      %v375 = vpop.permute.xlu0 %374
      %377 = vset.pattern.permute.xlu0 0
      %378 = vperm.xlu0 %377, %v366
      %v379 = vpop.permute.xlu0 %378
      %381 = vset.pattern.permute.xlu0 0
      %382 = vperm.xlu0 %381, %v367
      %v383 = vpop.permute.xlu0 %382
      %385 = vset.pattern.permute.xlu0 0
      %386 = vperm.xlu0 %385, %v368
      %v387 = vpop.permute.xlu0 %386
      %389 = vset.pattern.permute.xlu0 0
      %390 = vperm.xlu0 %389, %v369
      %v391 = vpop.permute.xlu0 %390
      %393 = vset.pattern.permute.xlu0 0
      %394 = vperm.xlu0 %393, %v370
      %v395 = vpop.permute.xlu0 %394
      %397 = vset.pattern.permute.xlu0 0
      %398 = vperm.xlu0 %397, %v371
      %v399 = vpop.permute.xlu0 %398
      %401 = vset.pattern.permute.xlu0 0
      %402 = vperm.xlu0 %401, %v372
      %v403 = vpop.permute.xlu0 %402
      %v405 = vmul.f32 %v375, %v193
      %v406 = vmul.f32 %v375, %v194
      %v407 = vmul.f32 %v379, %v193
      %v408 = vmul.f32 %v379, %v194
      %v409 = vmul.f32 %v383, %v193
      %v410 = vmul.f32 %v383, %v194
      %v411 = vmul.f32 %v387, %v193
      %v412 = vmul.f32 %v387, %v194
      %v413 = vmul.f32 %v391, %v193
      %v414 = vmul.f32 %v391, %v194
      %v415 = vmul.f32 %v395, %v193
      %v416 = vmul.f32 %v395, %v194
      %v417 = vmul.f32 %v399, %v193
      %v418 = vmul.f32 %v399, %v194
      %v419 = vmul.f32 %v403, %v193
      %v420 = vmul.f32 %v403, %v194
      %v421 = vadd.f32 %v332, %v405
      %v422 = vadd.f32 %v333, %v406
      %v423 = vadd.f32 %v334, %v407
      %v424 = vadd.f32 %v335, %v408
      %v425 = vadd.f32 %v336, %v409
      %v426 = vadd.f32 %v337, %v410
      %v427 = vadd.f32 %v338, %v411
      %v428 = vadd.f32 %v339, %v412
      %v429 = vadd.f32 %v340, %v413
      %v430 = vadd.f32 %v341, %v414
      %v431 = vadd.f32 %v342, %v415
      %v432 = vadd.f32 %v343, %v416
      %v433 = vadd.f32 %v344, %v417
      %v434 = vadd.f32 %v345, %v418
      %v435 = vadd.f32 %v346, %v419
      %v436 = vadd.f32 %v347, %v420
      %s437 = scalar_lea.vmem %s2, 16
      %v438 = vld [vmem:[%s437] sm:$0x1]
      %v439 = vld [vmem:[%s437 + $0x1] sm:$0x1]
      %v440 = vld [vmem:[%s437 + $0x2] sm:$0x1]
      %v441 = vld [vmem:[%s437 + $0x3] sm:$0x1]
      %v442 = vld [vmem:[%s437 + $0x4] sm:$0x1]
      %v443 = vld [vmem:[%s437 + $0x5] sm:$0x1]
      %v444 = vld [vmem:[%s437 + $0x6] sm:$0x1]
      %v445 = vld [vmem:[%s437 + $0x7] sm:$0x1]
      %v454 = vperm.slane %v438, 0
      %v455 = vperm.slane %v439, 0
      %v456 = vperm.slane %v440, 0
      %v457 = vperm.slane %v441, 0
      %v458 = vperm.slane %v442, 0
      %v459 = vperm.slane %v443, 0
      %v460 = vperm.slane %v444, 0
      %v461 = vperm.slane %v445, 0
      %462 = vset.pattern.permute.xlu0 0
      %463 = vperm.xlu0 %462, %v454
      %v464 = vpop.permute.xlu0 %463
      %466 = vset.pattern.permute.xlu0 0
      %467 = vperm.xlu0 %466, %v455
      %v468 = vpop.permute.xlu0 %467
      %470 = vset.pattern.permute.xlu0 0
      %471 = vperm.xlu0 %470, %v456
      %v472 = vpop.permute.xlu0 %471
      %474 = vset.pattern.permute.xlu0 0
      %475 = vperm.xlu0 %474, %v457
      %v476 = vpop.permute.xlu0 %475
      %478 = vset.pattern.permute.xlu0 0
      %479 = vperm.xlu0 %478, %v458
      %v480 = vpop.permute.xlu0 %479
      %482 = vset.pattern.permute.xlu0 0
      %483 = vperm.xlu0 %482, %v459
      %v484 = vpop.permute.xlu0 %483
      %486 = vset.pattern.permute.xlu0 0
      %487 = vperm.xlu0 %486, %v460
      %v488 = vpop.permute.xlu0 %487
      %490 = vset.pattern.permute.xlu0 0
      %491 = vperm.xlu0 %490, %v461
      %v492 = vpop.permute.xlu0 %491
      %v494 = vmul.f32 %v464, %v195
      %v495 = vmul.f32 %v464, %v196
      %v496 = vmul.f32 %v468, %v195
      %v497 = vmul.f32 %v468, %v196
      %v498 = vmul.f32 %v472, %v195
      %v499 = vmul.f32 %v472, %v196
      %v500 = vmul.f32 %v476, %v195
      %v501 = vmul.f32 %v476, %v196
      %v502 = vmul.f32 %v480, %v195
      %v503 = vmul.f32 %v480, %v196
      %v504 = vmul.f32 %v484, %v195
      %v505 = vmul.f32 %v484, %v196
      %v506 = vmul.f32 %v488, %v195
      %v507 = vmul.f32 %v488, %v196
      %v508 = vmul.f32 %v492, %v195
      %v509 = vmul.f32 %v492, %v196
      %v510 = vadd.f32 %v421, %v494
      %v511 = vadd.f32 %v422, %v495
      %v512 = vadd.f32 %v423, %v496
      %v513 = vadd.f32 %v424, %v497
      %v514 = vadd.f32 %v425, %v498
      %v515 = vadd.f32 %v426, %v499
      %v516 = vadd.f32 %v427, %v500
      %v517 = vadd.f32 %v428, %v501
      %v518 = vadd.f32 %v429, %v502
      %v519 = vadd.f32 %v430, %v503
      %v520 = vadd.f32 %v431, %v504
      %v521 = vadd.f32 %v432, %v505
      %v522 = vadd.f32 %v433, %v506
      %v523 = vadd.f32 %v434, %v507
      %v524 = vadd.f32 %v435, %v508
      %v525 = vadd.f32 %v436, %v509
      %s526 = scalar_lea.vmem %s2, 24
      %v527 = vld [vmem:[%s526] sm:$0x1]
      %v528 = vld [vmem:[%s526 + $0x1] sm:$0x1]
      %v529 = vld [vmem:[%s526 + $0x2] sm:$0x1]
      %v530 = vld [vmem:[%s526 + $0x3] sm:$0x1]
      %v531 = vld [vmem:[%s526 + $0x4] sm:$0x1]
      %v532 = vld [vmem:[%s526 + $0x5] sm:$0x1]
      %v533 = vld [vmem:[%s526 + $0x6] sm:$0x1]
      %v534 = vld [vmem:[%s526 + $0x7] sm:$0x1]
      %v543 = vperm.slane %v527, 0
      %v544 = vperm.slane %v528, 0
      %v545 = vperm.slane %v529, 0
      %v546 = vperm.slane %v530, 0
      %v547 = vperm.slane %v531, 0
      %v548 = vperm.slane %v532, 0
      %v549 = vperm.slane %v533, 0
      %v550 = vperm.slane %v534, 0
      %551 = vset.pattern.permute.xlu0 0
      %552 = vperm.xlu0 %551, %v543
      %v553 = vpop.permute.xlu0 %552
      %555 = vset.pattern.permute.xlu0 0
      %556 = vperm.xlu0 %555, %v544
      %v557 = vpop.permute.xlu0 %556
      %559 = vset.pattern.permute.xlu0 0
      %560 = vperm.xlu0 %559, %v545
      %v561 = vpop.permute.xlu0 %560
      %563 = vset.pattern.permute.xlu0 0
      %564 = vperm.xlu0 %563, %v546
      %v565 = vpop.permute.xlu0 %564
      %567 = vset.pattern.permute.xlu0 0
      %568 = vperm.xlu0 %567, %v547
      %v569 = vpop.permute.xlu0 %568
      %571 = vset.pattern.permute.xlu0 0
      %572 = vperm.xlu0 %571, %v548
      %v573 = vpop.permute.xlu0 %572
      %575 = vset.pattern.permute.xlu0 0
      %576 = vperm.xlu0 %575, %v549
      %v577 = vpop.permute.xlu0 %576
      %579 = vset.pattern.permute.xlu0 0
      %580 = vperm.xlu0 %579, %v550
      %v581 = vpop.permute.xlu0 %580
      %v583 = vmul.f32 %v553, %v197
      %v584 = vmul.f32 %v553, %v198
      %v585 = vmul.f32 %v557, %v197
      %v586 = vmul.f32 %v557, %v198
      %v587 = vmul.f32 %v561, %v197
      %v588 = vmul.f32 %v561, %v198
      %v589 = vmul.f32 %v565, %v197
      %v590 = vmul.f32 %v565, %v198
      %v591 = vmul.f32 %v569, %v197
      %v592 = vmul.f32 %v569, %v198
      %v593 = vmul.f32 %v573, %v197
      %v594 = vmul.f32 %v573, %v198
      %v595 = vmul.f32 %v577, %v197
      %v596 = vmul.f32 %v577, %v198
      %v597 = vmul.f32 %v581, %v197
      %v598 = vmul.f32 %v581, %v198
      %v599 = vadd.f32 %v510, %v583
      %v600 = vadd.f32 %v511, %v584
      %v601 = vadd.f32 %v512, %v585
      %v602 = vadd.f32 %v513, %v586
      %v603 = vadd.f32 %v514, %v587
      %v604 = vadd.f32 %v515, %v588
      %v605 = vadd.f32 %v516, %v589
      %v606 = vadd.f32 %v517, %v590
      %v607 = vadd.f32 %v518, %v591
      %v608 = vadd.f32 %v519, %v592
      %v609 = vadd.f32 %v520, %v593
      %v610 = vadd.f32 %v521, %v594
      %v611 = vadd.f32 %v522, %v595
      %v612 = vadd.f32 %v523, %v596
      %v613 = vadd.f32 %v524, %v597
      %v614 = vadd.f32 %v525, %v598
      %s615 = scalar_lea.vmem %s2, 32
      %v616 = vld [vmem:[%s615] sm:$0x1]
      %v617 = vld [vmem:[%s615 + $0x1] sm:$0x1]
      %v618 = vld [vmem:[%s615 + $0x2] sm:$0x1]
      %v619 = vld [vmem:[%s615 + $0x3] sm:$0x1]
      %v620 = vld [vmem:[%s615 + $0x4] sm:$0x1]
      %v621 = vld [vmem:[%s615 + $0x5] sm:$0x1]
      %v622 = vld [vmem:[%s615 + $0x6] sm:$0x1]
      %v623 = vld [vmem:[%s615 + $0x7] sm:$0x1]
      %v632 = vperm.slane %v616, 0
      %v633 = vperm.slane %v617, 0
      %v634 = vperm.slane %v618, 0
      %v635 = vperm.slane %v619, 0
      %v636 = vperm.slane %v620, 0
      %v637 = vperm.slane %v621, 0
      %v638 = vperm.slane %v622, 0
      %v639 = vperm.slane %v623, 0
      %640 = vset.pattern.permute.xlu0 0
      %641 = vperm.xlu0 %640, %v632
      %v642 = vpop.permute.xlu0 %641
      %644 = vset.pattern.permute.xlu0 0
      %645 = vperm.xlu0 %644, %v633
      %v646 = vpop.permute.xlu0 %645
      %648 = vset.pattern.permute.xlu0 0
      %649 = vperm.xlu0 %648, %v634
      %v650 = vpop.permute.xlu0 %649
      %652 = vset.pattern.permute.xlu0 0
      %653 = vperm.xlu0 %652, %v635
      %v654 = vpop.permute.xlu0 %653
      %656 = vset.pattern.permute.xlu0 0
      %657 = vperm.xlu0 %656, %v636
      %v658 = vpop.permute.xlu0 %657
      %660 = vset.pattern.permute.xlu0 0
      %661 = vperm.xlu0 %660, %v637
      %v662 = vpop.permute.xlu0 %661
      %664 = vset.pattern.permute.xlu0 0
      %665 = vperm.xlu0 %664, %v638
      %v666 = vpop.permute.xlu0 %665
      %668 = vset.pattern.permute.xlu0 0
      %669 = vperm.xlu0 %668, %v639
      %v670 = vpop.permute.xlu0 %669
      %v672 = vmul.f32 %v642, %v199
      %v673 = vmul.f32 %v642, %v200
      %v674 = vmul.f32 %v646, %v199
      %v675 = vmul.f32 %v646, %v200
      %v676 = vmul.f32 %v650, %v199
      %v677 = vmul.f32 %v650, %v200
      %v678 = vmul.f32 %v654, %v199
      %v679 = vmul.f32 %v654, %v200
      %v680 = vmul.f32 %v658, %v199
      %v681 = vmul.f32 %v658, %v200
      %v682 = vmul.f32 %v662, %v199
      %v683 = vmul.f32 %v662, %v200
      %v684 = vmul.f32 %v666, %v199
      %v685 = vmul.f32 %v666, %v200
      %v686 = vmul.f32 %v670, %v199
      %v687 = vmul.f32 %v670, %v200
      %v688 = vadd.f32 %v599, %v672
      %v689 = vadd.f32 %v600, %v673
      %v690 = vadd.f32 %v601, %v674
      %v691 = vadd.f32 %v602, %v675
      %v692 = vadd.f32 %v603, %v676
      %v693 = vadd.f32 %v604, %v677
      %v694 = vadd.f32 %v605, %v678
      %v695 = vadd.f32 %v606, %v679
      %v696 = vadd.f32 %v607, %v680
      %v697 = vadd.f32 %v608, %v681
      %v698 = vadd.f32 %v609, %v682
      %v699 = vadd.f32 %v610, %v683
      %v700 = vadd.f32 %v611, %v684
      %v701 = vadd.f32 %v612, %v685
      %v702 = vadd.f32 %v613, %v686
      %v703 = vadd.f32 %v614, %v687
      %s704 = scalar_lea.vmem %s2, 40
      %v705 = vld [vmem:[%s704] sm:$0x1]
      %v706 = vld [vmem:[%s704 + $0x1] sm:$0x1]
      %v707 = vld [vmem:[%s704 + $0x2] sm:$0x1]
      %v708 = vld [vmem:[%s704 + $0x3] sm:$0x1]
      %v709 = vld [vmem:[%s704 + $0x4] sm:$0x1]
      %v710 = vld [vmem:[%s704 + $0x5] sm:$0x1]
      %v711 = vld [vmem:[%s704 + $0x6] sm:$0x1]
      %v712 = vld [vmem:[%s704 + $0x7] sm:$0x1]
      %v721 = vperm.slane %v705, 0
      %v722 = vperm.slane %v706, 0
      %v723 = vperm.slane %v707, 0
      %v724 = vperm.slane %v708, 0
      %v725 = vperm.slane %v709, 0
      %v726 = vperm.slane %v710, 0
      %v727 = vperm.slane %v711, 0
      %v728 = vperm.slane %v712, 0
      %729 = vset.pattern.permute.xlu0 0
      %730 = vperm.xlu0 %729, %v721
      %v731 = vpop.permute.xlu0 %730
      %733 = vset.pattern.permute.xlu0 0
      %734 = vperm.xlu0 %733, %v722
      %v735 = vpop.permute.xlu0 %734
      %737 = vset.pattern.permute.xlu0 0
      %738 = vperm.xlu0 %737, %v723
      %v739 = vpop.permute.xlu0 %738
      %741 = vset.pattern.permute.xlu0 0
      %742 = vperm.xlu0 %741, %v724
      %v743 = vpop.permute.xlu0 %742
      %745 = vset.pattern.permute.xlu0 0
      %746 = vperm.xlu0 %745, %v725
      %v747 = vpop.permute.xlu0 %746
      %749 = vset.pattern.permute.xlu0 0
      %750 = vperm.xlu0 %749, %v726
      %v751 = vpop.permute.xlu0 %750
      %753 = vset.pattern.permute.xlu0 0
      %754 = vperm.xlu0 %753, %v727
      %v755 = vpop.permute.xlu0 %754
      %757 = vset.pattern.permute.xlu0 0
      %758 = vperm.xlu0 %757, %v728
      %v759 = vpop.permute.xlu0 %758
      %v761 = vmul.f32 %v731, %v201
      %v762 = vmul.f32 %v731, %v202
      %v763 = vmul.f32 %v735, %v201
      %v764 = vmul.f32 %v735, %v202
      %v765 = vmul.f32 %v739, %v201
      %v766 = vmul.f32 %v739, %v202
      %v767 = vmul.f32 %v743, %v201
      %v768 = vmul.f32 %v743, %v202
      %v769 = vmul.f32 %v747, %v201
      %v770 = vmul.f32 %v747, %v202
      %v771 = vmul.f32 %v751, %v201
      %v772 = vmul.f32 %v751, %v202
      %v773 = vmul.f32 %v755, %v201
      %v774 = vmul.f32 %v755, %v202
      %v775 = vmul.f32 %v759, %v201
      %v776 = vmul.f32 %v759, %v202
      %v777 = vadd.f32 %v688, %v761
      %v778 = vadd.f32 %v689, %v762
      %v779 = vadd.f32 %v690, %v763
      %v780 = vadd.f32 %v691, %v764
      %v781 = vadd.f32 %v692, %v765
      %v782 = vadd.f32 %v693, %v766
      %v783 = vadd.f32 %v694, %v767
      %v784 = vadd.f32 %v695, %v768
      %v785 = vadd.f32 %v696, %v769
      %v786 = vadd.f32 %v697, %v770
      %v787 = vadd.f32 %v698, %v771
      %v788 = vadd.f32 %v699, %v772
      %v789 = vadd.f32 %v700, %v773
      %v790 = vadd.f32 %v701, %v774
      %v791 = vadd.f32 %v702, %v775
      %v792 = vadd.f32 %v703, %v776
      %s793 = scalar_lea.vmem %s2, 56
      %v794 = vld [vmem:[%s793] sm:$0x1]
      %v795 = vld [vmem:[%s793 + $0x1] sm:$0x1]
      %v796 = vld [vmem:[%s793 + $0x2] sm:$0x1]
      %v797 = vld [vmem:[%s793 + $0x3] sm:$0x1]
      %v798 = vld [vmem:[%s793 + $0x4] sm:$0x1]
      %v799 = vld [vmem:[%s793 + $0x5] sm:$0x1]
      %v800 = vld [vmem:[%s793 + $0x6] sm:$0x1]
      %v801 = vld [vmem:[%s793 + $0x7] sm:$0x1]
      %v810 = vperm.slane %v794, 0
      %v811 = vperm.slane %v795, 0
      %v812 = vperm.slane %v796, 0
      %v813 = vperm.slane %v797, 0
      %v814 = vperm.slane %v798, 0
      %v815 = vperm.slane %v799, 0
      %v816 = vperm.slane %v800, 0
      %v817 = vperm.slane %v801, 0
      %818 = vset.pattern.permute.xlu0 0
      %819 = vperm.xlu0 %818, %v810
      %v820 = vpop.permute.xlu0 %819
      %822 = vset.pattern.permute.xlu0 0
      %823 = vperm.xlu0 %822, %v811
      %v824 = vpop.permute.xlu0 %823
      %826 = vset.pattern.permute.xlu0 0
      %827 = vperm.xlu0 %826, %v812
      %v828 = vpop.permute.xlu0 %827
      %830 = vset.pattern.permute.xlu0 0
      %831 = vperm.xlu0 %830, %v813
      %v832 = vpop.permute.xlu0 %831
      %834 = vset.pattern.permute.xlu0 0
      %835 = vperm.xlu0 %834, %v814
      %v836 = vpop.permute.xlu0 %835
      %838 = vset.pattern.permute.xlu0 0
      %839 = vperm.xlu0 %838, %v815
      %v840 = vpop.permute.xlu0 %839
      %842 = vset.pattern.permute.xlu0 0
      %843 = vperm.xlu0 %842, %v816
      %v844 = vpop.permute.xlu0 %843
      %846 = vset.pattern.permute.xlu0 0
      %847 = vperm.xlu0 %846, %v817
      %v848 = vpop.permute.xlu0 %847
      %v850 = vmul.f32 %v777, %v820
      %v851 = vmul.f32 %v778, %v820
      %v852 = vmul.f32 %v779, %v824
      %v853 = vmul.f32 %v780, %v824
      %v854 = vmul.f32 %v781, %v828
      %v855 = vmul.f32 %v782, %v828
      %v856 = vmul.f32 %v783, %v832
      %v857 = vmul.f32 %v784, %v832
      %v858 = vmul.f32 %v785, %v836
      %v859 = vmul.f32 %v786, %v836
      %v860 = vmul.f32 %v787, %v840
      %v861 = vmul.f32 %v788, %v840
      %v862 = vmul.f32 %v789, %v844
      %v863 = vmul.f32 %v790, %v844
      %v864 = vmul.f32 %v791, %v848
      %v865 = vmul.f32 %v792, %v848
      %s866 = scalar_lea.vmem %s2, 64
      %v867 = vld [vmem:[%s866] sm:$0x1]
      %v868 = vld [vmem:[%s866 + $0x1] sm:$0x1]
      %v869 = vld [vmem:[%s866 + $0x2] sm:$0x1]
      %v870 = vld [vmem:[%s866 + $0x3] sm:$0x1]
      %v871 = vld [vmem:[%s866 + $0x4] sm:$0x1]
      %v872 = vld [vmem:[%s866 + $0x5] sm:$0x1]
      %v873 = vld [vmem:[%s866 + $0x6] sm:$0x1]
      %v874 = vld [vmem:[%s866 + $0x7] sm:$0x1]
      %v883 = vperm.slane %v867, 0
      %v884 = vperm.slane %v868, 0
      %v885 = vperm.slane %v869, 0
      %v886 = vperm.slane %v870, 0
      %v887 = vperm.slane %v871, 0
      %v888 = vperm.slane %v872, 0
      %v889 = vperm.slane %v873, 0
      %v890 = vperm.slane %v874, 0
      %891 = vset.pattern.permute.xlu0 0
      %892 = vperm.xlu0 %891, %v883
      %v893 = vpop.permute.xlu0 %892
      %895 = vset.pattern.permute.xlu0 0
      %896 = vperm.xlu0 %895, %v884
      %v897 = vpop.permute.xlu0 %896
      %899 = vset.pattern.permute.xlu0 0
      %900 = vperm.xlu0 %899, %v885
      %v901 = vpop.permute.xlu0 %900
      %903 = vset.pattern.permute.xlu0 0
      %904 = vperm.xlu0 %903, %v886
      %v905 = vpop.permute.xlu0 %904
      %907 = vset.pattern.permute.xlu0 0
      %908 = vperm.xlu0 %907, %v887
      %v909 = vpop.permute.xlu0 %908
      %911 = vset.pattern.permute.xlu0 0
      %912 = vperm.xlu0 %911, %v888
      %v913 = vpop.permute.xlu0 %912
      %915 = vset.pattern.permute.xlu0 0
      %916 = vperm.xlu0 %915, %v889
      %v917 = vpop.permute.xlu0 %916
      %919 = vset.pattern.permute.xlu0 0
      %920 = vperm.xlu0 %919, %v890
      %v921 = vpop.permute.xlu0 %920
      %v923 = vadd.f32 %v850, %v893
      %v924 = vadd.f32 %v851, %v893
      %v925 = vadd.f32 %v852, %v897
      %v926 = vadd.f32 %v853, %v897
      %v927 = vadd.f32 %v854, %v901
      %v928 = vadd.f32 %v855, %v901
      %v929 = vadd.f32 %v856, %v905
      %v930 = vadd.f32 %v857, %v905
      %v931 = vadd.f32 %v858, %v909
      %v932 = vadd.f32 %v859, %v909
      %v933 = vadd.f32 %v860, %v913
      %v934 = vadd.f32 %v861, %v913
      %v935 = vadd.f32 %v862, %v917
      %v936 = vadd.f32 %v863, %v917
      %v937 = vadd.f32 %v864, %v921
      %v938 = vadd.f32 %v865, %v921
      %s939 = scalar_lea.vmem %s2, 72
      %v940 = vld [vmem:[%s939] sm:$0x1]
      %v941 = vld [vmem:[%s939 + $0x1] sm:$0x1]
      %v942 = vld [vmem:[%s939 + $0x2] sm:$0x1]
      %v943 = vld [vmem:[%s939 + $0x3] sm:$0x1]
      %v944 = vld [vmem:[%s939 + $0x4] sm:$0x1]
      %v945 = vld [vmem:[%s939 + $0x5] sm:$0x1]
      %v946 = vld [vmem:[%s939 + $0x6] sm:$0x1]
      %v947 = vld [vmem:[%s939 + $0x7] sm:$0x1]
      %v956 = vperm.slane %v940, 0
      %v957 = vperm.slane %v941, 0
      %v958 = vperm.slane %v942, 0
      %v959 = vperm.slane %v943, 0
      %v960 = vperm.slane %v944, 0
      %v961 = vperm.slane %v945, 0
      %v962 = vperm.slane %v946, 0
      %v963 = vperm.slane %v947, 0
      %964 = vset.pattern.permute.xlu0 0
      %965 = vperm.xlu0 %964, %v956
      %v966 = vpop.permute.xlu0 %965
      %968 = vset.pattern.permute.xlu0 0
      %969 = vperm.xlu0 %968, %v957
      %v970 = vpop.permute.xlu0 %969
      %972 = vset.pattern.permute.xlu0 0
      %973 = vperm.xlu0 %972, %v958
      %v974 = vpop.permute.xlu0 %973
      %976 = vset.pattern.permute.xlu0 0
      %977 = vperm.xlu0 %976, %v959
      %v978 = vpop.permute.xlu0 %977
      %980 = vset.pattern.permute.xlu0 0
      %981 = vperm.xlu0 %980, %v960
      %v982 = vpop.permute.xlu0 %981
      %984 = vset.pattern.permute.xlu0 0
      %985 = vperm.xlu0 %984, %v961
      %v986 = vpop.permute.xlu0 %985
      %988 = vset.pattern.permute.xlu0 0
      %989 = vperm.xlu0 %988, %v962
      %v990 = vpop.permute.xlu0 %989
      %992 = vset.pattern.permute.xlu0 0
      %993 = vperm.xlu0 %992, %v963
      %v994 = vpop.permute.xlu0 %993
      %v996 = vmul.f32 %v777, %v966
      %v997 = vmul.f32 %v778, %v966
      %v998 = vmul.f32 %v779, %v970
      %v999 = vmul.f32 %v780, %v970
      %v1000 = vmul.f32 %v781, %v974
      %v1001 = vmul.f32 %v782, %v974
      %v1002 = vmul.f32 %v783, %v978
      %v1003 = vmul.f32 %v784, %v978
      %v1004 = vmul.f32 %v785, %v982
      %v1005 = vmul.f32 %v786, %v982
      %v1006 = vmul.f32 %v787, %v986
      %v1007 = vmul.f32 %v788, %v986
      %v1008 = vmul.f32 %v789, %v990
      %v1009 = vmul.f32 %v790, %v990
      %v1010 = vmul.f32 %v791, %v994
      %v1011 = vmul.f32 %v792, %v994
      %s1012 = scalar_lea.vmem %s2, 80
      %v1013 = vld [vmem:[%s1012] sm:$0x1]
      %v1014 = vld [vmem:[%s1012 + $0x1] sm:$0x1]
      %v1015 = vld [vmem:[%s1012 + $0x2] sm:$0x1]
      %v1016 = vld [vmem:[%s1012 + $0x3] sm:$0x1]
      %v1017 = vld [vmem:[%s1012 + $0x4] sm:$0x1]
      %v1018 = vld [vmem:[%s1012 + $0x5] sm:$0x1]
      %v1019 = vld [vmem:[%s1012 + $0x6] sm:$0x1]
      %v1020 = vld [vmem:[%s1012 + $0x7] sm:$0x1]
      %v1029 = vperm.slane %v1013, 0
      %v1030 = vperm.slane %v1014, 0
      %v1031 = vperm.slane %v1015, 0
      %v1032 = vperm.slane %v1016, 0
      %v1033 = vperm.slane %v1017, 0
      %v1034 = vperm.slane %v1018, 0
      %v1035 = vperm.slane %v1019, 0
      %v1036 = vperm.slane %v1020, 0
      %1037 = vset.pattern.permute.xlu0 0
      %1038 = vperm.xlu0 %1037, %v1029
      %v1039 = vpop.permute.xlu0 %1038
      %1041 = vset.pattern.permute.xlu0 0
      %1042 = vperm.xlu0 %1041, %v1030
      %v1043 = vpop.permute.xlu0 %1042
      %1045 = vset.pattern.permute.xlu0 0
      %1046 = vperm.xlu0 %1045, %v1031
      %v1047 = vpop.permute.xlu0 %1046
      %1049 = vset.pattern.permute.xlu0 0
      %1050 = vperm.xlu0 %1049, %v1032
      %v1051 = vpop.permute.xlu0 %1050
      %1053 = vset.pattern.permute.xlu0 0
      %1054 = vperm.xlu0 %1053, %v1033
      %v1055 = vpop.permute.xlu0 %1054
      %1057 = vset.pattern.permute.xlu0 0
      %1058 = vperm.xlu0 %1057, %v1034
      %v1059 = vpop.permute.xlu0 %1058
      %1061 = vset.pattern.permute.xlu0 0
      %1062 = vperm.xlu0 %1061, %v1035
      %v1063 = vpop.permute.xlu0 %1062
      %1065 = vset.pattern.permute.xlu0 0
      %1066 = vperm.xlu0 %1065, %v1036
      %v1067 = vpop.permute.xlu0 %1066
      %v1069 = vadd.f32 %v996, %v1039
      %v1070 = vadd.f32 %v997, %v1039
      %v1071 = vadd.f32 %v998, %v1043
      %v1072 = vadd.f32 %v999, %v1043
      %v1073 = vadd.f32 %v1000, %v1047
      %v1074 = vadd.f32 %v1001, %v1047
      %v1075 = vadd.f32 %v1002, %v1051
      %v1076 = vadd.f32 %v1003, %v1051
      %v1077 = vadd.f32 %v1004, %v1055
      %v1078 = vadd.f32 %v1005, %v1055
      %v1079 = vadd.f32 %v1006, %v1059
      %v1080 = vadd.f32 %v1007, %v1059
      %v1081 = vadd.f32 %v1008, %v1063
      %v1082 = vadd.f32 %v1009, %v1063
      %v1083 = vadd.f32 %v1010, %v1067
      %v1084 = vadd.f32 %v1011, %v1067
      %v1085 = vmul.f32 %v923, %v1069
      %v1086 = vmul.f32 %v924, %v1070
      %v1087 = vmul.f32 %v925, %v1071
      %v1088 = vmul.f32 %v926, %v1072
      %v1089 = vmul.f32 %v927, %v1073
      %v1090 = vmul.f32 %v928, %v1074
      %v1091 = vmul.f32 %v929, %v1075
      %v1092 = vmul.f32 %v930, %v1076
      %v1093 = vmul.f32 %v931, %v1077
      %v1094 = vmul.f32 %v932, %v1078
      %v1095 = vmul.f32 %v933, %v1079
      %v1096 = vmul.f32 %v934, %v1080
      %v1097 = vmul.f32 %v935, %v1081
      %v1098 = vmul.f32 %v936, %v1082
      %v1099 = vmul.f32 %v937, %v1083
      %v1100 = vmul.f32 %v938, %v1084
      %s1101 = scalar_lea.vmem %s2, 88
      %v1102 = vld [vmem:[%s1101] sm:$0x1]
      %v1103 = vld [vmem:[%s1101 + $0x1] sm:$0x1]
      %v1104 = vld [vmem:[%s1101 + $0x2] sm:$0x1]
      %v1105 = vld [vmem:[%s1101 + $0x3] sm:$0x1]
      %v1106 = vld [vmem:[%s1101 + $0x4] sm:$0x1]
      %v1107 = vld [vmem:[%s1101 + $0x5] sm:$0x1]
      %v1108 = vld [vmem:[%s1101 + $0x6] sm:$0x1]
      %v1109 = vld [vmem:[%s1101 + $0x7] sm:$0x1]
      %v1118 = vperm.slane %v1102, 0
      %v1119 = vperm.slane %v1103, 0
      %v1120 = vperm.slane %v1104, 0
      %v1121 = vperm.slane %v1105, 0
      %v1122 = vperm.slane %v1106, 0
      %v1123 = vperm.slane %v1107, 0
      %v1124 = vperm.slane %v1108, 0
      %v1125 = vperm.slane %v1109, 0
      %1126 = vset.pattern.permute.xlu0 0
      %1127 = vperm.xlu0 %1126, %v1118
      %v1128 = vpop.permute.xlu0 %1127
      %1130 = vset.pattern.permute.xlu0 0
      %1131 = vperm.xlu0 %1130, %v1119
      %v1132 = vpop.permute.xlu0 %1131
      %1134 = vset.pattern.permute.xlu0 0
      %1135 = vperm.xlu0 %1134, %v1120
      %v1136 = vpop.permute.xlu0 %1135
      %1138 = vset.pattern.permute.xlu0 0
      %1139 = vperm.xlu0 %1138, %v1121
      %v1140 = vpop.permute.xlu0 %1139
      %1142 = vset.pattern.permute.xlu0 0
      %1143 = vperm.xlu0 %1142, %v1122
      %v1144 = vpop.permute.xlu0 %1143
      %1146 = vset.pattern.permute.xlu0 0
      %1147 = vperm.xlu0 %1146, %v1123
      %v1148 = vpop.permute.xlu0 %1147
      %1150 = vset.pattern.permute.xlu0 0
      %1151 = vperm.xlu0 %1150, %v1124
      %v1152 = vpop.permute.xlu0 %1151
      %1154 = vset.pattern.permute.xlu0 0
      %1155 = vperm.xlu0 %1154, %v1125
      %v1156 = vpop.permute.xlu0 %1155
      %vm1158 = vcmask 146432
      %1159 = vst.msk [vmem:[%s190] sm:$0xff] %vm1158, %v1128
      %1160 = vst.msk [vmem:[%s190 + $0x8] sm:$0xff] %vm1158, %v1128
      %vm1161 = vcmask 140288
      %1162 = vst.msk [vmem:[%s190 + $0x10] sm:$0x3] %vm1161, %v1128
      %1163 = vst.msk [vmem:[%s190 + $0x18] sm:$0xff] %vm1158, %v1132
      %1164 = vst.msk [vmem:[%s190 + $0x20] sm:$0xff] %vm1158, %v1132
      %1165 = vst.msk [vmem:[%s190 + $0x28] sm:$0x3] %vm1161, %v1132
      %1166 = vst.msk [vmem:[%s190 + $0x30] sm:$0xff] %vm1158, %v1136
      %1167 = vst.msk [vmem:[%s190 + $0x38] sm:$0xff] %vm1158, %v1136
      %1168 = vst.msk [vmem:[%s190 + $0x40] sm:$0x3] %vm1161, %v1136
      %1169 = vst.msk [vmem:[%s190 + $0x48] sm:$0xff] %vm1158, %v1140
      %1170 = vst.msk [vmem:[%s190 + $0x50] sm:$0xff] %vm1158, %v1140
      %1171 = vst.msk [vmem:[%s190 + $0x58] sm:$0x3] %vm1161, %v1140
      %1172 = vst.msk [vmem:[%s190 + $0x60] sm:$0xff] %vm1158, %v1144
      %1173 = vst.msk [vmem:[%s190 + $0x68] sm:$0xff] %vm1158, %v1144
      %1174 = vst.msk [vmem:[%s190 + $0x70] sm:$0x3] %vm1161, %v1144
      %1175 = vst.msk [vmem:[%s190 + $0x78] sm:$0xff] %vm1158, %v1148
      %1176 = vst.msk [vmem:[%s190 + $0x80] sm:$0xff] %vm1158, %v1148
      %1177 = vst.msk [vmem:[%s190 + $0x88] sm:$0x3] %vm1161, %v1148
      %1178 = vst.msk [vmem:[%s190 + $0x90] sm:$0xff] %vm1158, %v1152
      %1179 = vst.msk [vmem:[%s190 + $0x98] sm:$0xff] %vm1158, %v1152
      %1180 = vst.msk [vmem:[%s190 + $0xa0] sm:$0x3] %vm1161, %v1152
      %1181 = vst.msk [vmem:[%s190 + $0xa8] sm:$0xff] %vm1158, %v1156
      %1182 = vst.msk [vmem:[%s190 + $0xb0] sm:$0xff] %vm1158, %v1156
      %1183 = vst.msk [vmem:[%s190 + $0xb8] sm:$0x3] %vm1161, %v1156
      %1200 = vrot.lane.b32.xlu0 %v1085, 1
      %v1201 = vpop.permute.xlu0 %1200
      %1202 = vrot.lane.b32.xlu0 %v1086, 1
      %v1203 = vpop.permute.xlu0 %1202
      %1204 = vrot.lane.b32.xlu0 %v1087, 1
      %v1205 = vpop.permute.xlu0 %1204
      %1206 = vrot.lane.b32.xlu0 %v1088, 1
      %v1207 = vpop.permute.xlu0 %1206
      %1208 = vrot.lane.b32.xlu0 %v1089, 1
      %v1209 = vpop.permute.xlu0 %1208
      %1210 = vrot.lane.b32.xlu0 %v1090, 1
      %v1211 = vpop.permute.xlu0 %1210
      %1212 = vrot.lane.b32.xlu0 %v1091, 1
      %v1213 = vpop.permute.xlu0 %1212
      %1214 = vrot.lane.b32.xlu0 %v1092, 1
      %v1215 = vpop.permute.xlu0 %1214
      %1216 = vrot.lane.b32.xlu0 %v1093, 1
      %v1217 = vpop.permute.xlu0 %1216
      %1218 = vrot.lane.b32.xlu0 %v1094, 1
      %v1219 = vpop.permute.xlu0 %1218
      %1220 = vrot.lane.b32.xlu0 %v1095, 1
      %v1221 = vpop.permute.xlu0 %1220
      %1222 = vrot.lane.b32.xlu0 %v1096, 1
      %v1223 = vpop.permute.xlu0 %1222
      %1224 = vrot.lane.b32.xlu0 %v1097, 1
      %v1225 = vpop.permute.xlu0 %1224
      %1226 = vrot.lane.b32.xlu0 %v1098, 1
      %v1227 = vpop.permute.xlu0 %1226
      %1228 = vrot.lane.b32.xlu0 %v1099, 1
      %v1229 = vpop.permute.xlu0 %1228
      %1230 = vrot.lane.b32.xlu0 %v1100, 1
      %v1231 = vpop.permute.xlu0 %1230
      %vm1248 = vcmask 138248
      %1249 = vst.msk [vmem:[%s190 + $0x1] sm:$0xff] %vm1248, %v1201
      %1250 = vst.msk [vmem:[%s190 + $0x9] sm:$0xff] %vm1248, %v1203
      %1251 = vst.msk [vmem:[%s190 + $0x19] sm:$0xff] %vm1248, %v1205
      %1252 = vst.msk [vmem:[%s190 + $0x21] sm:$0xff] %vm1248, %v1207
      %1253 = vst.msk [vmem:[%s190 + $0x31] sm:$0xff] %vm1248, %v1209
      %1254 = vst.msk [vmem:[%s190 + $0x39] sm:$0xff] %vm1248, %v1211
      %1255 = vst.msk [vmem:[%s190 + $0x49] sm:$0xff] %vm1248, %v1213
      %1256 = vst.msk [vmem:[%s190 + $0x51] sm:$0xff] %vm1248, %v1215
      %1257 = vst.msk [vmem:[%s190 + $0x61] sm:$0xff] %vm1248, %v1217
      %1258 = vst.msk [vmem:[%s190 + $0x69] sm:$0xff] %vm1248, %v1219
      %1259 = vst.msk [vmem:[%s190 + $0x79] sm:$0xff] %vm1248, %v1221
      %1260 = vst.msk [vmem:[%s190 + $0x81] sm:$0xff] %vm1248, %v1223
      %1261 = vst.msk [vmem:[%s190 + $0x91] sm:$0xff] %vm1248, %v1225
      %1262 = vst.msk [vmem:[%s190 + $0x99] sm:$0xff] %vm1248, %v1227
      %1263 = vst.msk [vmem:[%s190 + $0xa9] sm:$0xff] %vm1248, %v1229
      %1264 = vst.msk [vmem:[%s190 + $0xb1] sm:$0xff] %vm1248, %v1231
      %p1265 = scmp.lt.s32.totalorder %s14, 1
      %s1266 = scalar_select %p1265, %s14, 1
      %s1267 = smul.addr %s1266, 24
      %s1268 = smul.addr %s1267, 8
      %s1269 = scalar_lea.vmem %s3, %s1268
      // Predicated region
      $region33: #{_model_forward_impl.3} parent=31 // pred_check
        %p1270 = pneg %p105
      $region34: #{_model_forward_impl.3} parent=31 // pred_check_branch
        %1272 = sbr.rel (%p1270) target = $region36
      $region35: #{_model_forward_impl.3} parent=31 // pred_region
        _
      $region36: #{_model_forward_impl.3} parent=31 // pred_fallthru
        _
    $region32: #{_model_forward_impl.3} parent=5 // pred_fallthru
      _
    %p1273 = scmp.le.s32.totalorder 2, %s9
    // Predicated region
    $region37: #{_model_forward_impl.3} parent=5 // pred_check
      %p1274 = pneg %p1273
    $region38: #{_model_forward_impl.3} parent=5 // pred_check_branch
      %1276 = sbr.rel (%p1274) target = $region40
    $region39: #{_model_forward_impl.3} parent=5 // pred_region
      %s1277 = ssub.s32 %s9, 2
      // Predicated region
      $region41: #{_model_forward_impl.3} parent=39 // pred_check
        %p1278 = pneg %p111
      $region42: #{_model_forward_impl.3} parent=39 // pred_check_branch
        %1280 = sbr.rel (%p1278) target = $region44
      $region43: #{_model_forward_impl.3} parent=39 // pred_region
        %p1281 = scmp.lt.s32.totalorder %s15, 1
        %s1282 = scalar_select %p1281, %s15, 1
        %s1283 = smul.addr %s1282, 24
        %s1284 = smul.addr %s1283, 8
        %s1285 = scalar_lea.vmem %s3, %s1284
      $region44: #{_model_forward_impl.3} parent=39 // pred_fallthru
        _
    $region40: #{_model_forward_impl.3} parent=5 // pred_fallthru
      _
  $region6: #{_model_forward_impl.3} parent=0 // loop_footer
    %s13 = sadd.s32 1, %s9
  $region7: #{_model_forward_impl.3} parent=0 // loop_footer_branch
    %8 = sbr.rel target = $region3
  $region8: #{_model_forward_impl.3} parent=0 // loop_exit
    _

</llo_original>
